<compile_context>
chip_gen: v5e
topology: v5e:2x2
jax: 0.10.0
libtpu: 0.0.40
codegen_flags: <defaults>
</compile_context>

<pallas_src>
import functools

import jax
import jax.numpy as jnp
from jax.experimental import pallas as pl
from jax.experimental.pallas import tpu as pltpu


def _modconv_kernel(sm_ref, d_ref, x_ref, w_ref, o_ref, im_ref, *,
                    K, W, use_fused_taps):
    # sm_ref : (1, Cin, 1)        per-sample modulation  gain*(style+1), f32
    # d_ref  : (1, CoutT, 1)      per-sample demod coeff for this Cout tile, f32
    # x_ref  : (1, Cin, H*W)      per-sample input, rows flattened, f32
    # w_ref  : (CoutT, K*K*Cin)   batch-invariant tap-major weight, bf16
    # o_ref  : (1, CoutT, Ho*W)   full-width output rows (lane-dense), f32
    # im_ref : (K*K*Cin, Ho*W)    style-modulated im2col scratch, f32
    Cin = sm_ref.shape[1]
    HW = x_ref.shape[2]
    HoWf = o_ref.shape[2]
    CoutT = w_ref.shape[0]
    j = pl.program_id(1)

    # Build the style-modulated im2col slab once per sample (only at the first
    # Cout tile); it persists in VMEM scratch and is reused by every Cout tile.
    # Row t*Cin + i holds channel i shifted by tap t = kh*K + kw, matching the
    # tap-major weight layout.
    @pl.when(j == 0)
    def _build_im2col():
        smod = sm_ref[0]                                  # (Cin, 1) f32
        for kh in range(K):
            for kw in range(K):
                t = kh * K + kw
                off = kh * W + kw
                valid = min(HoWf, HW - off)               # static per tap
                rows = pl.ds(t * Cin, Cin)
                xs = x_ref[0, :, off:off + valid]         # (Cin, valid) f32
                im_ref[rows, :valid] = xs * smod          # modulate in f32
                if valid < HoWf:
                    # These tail lanes only feed the discarded wrap columns;
                    # zero them so no stale VMEM leaks into the output slab.
                    im_ref[rows, valid:] = jnp.zeros(
                        (Cin, HoWf - valid), im_ref.dtype)

    # bf16 MXU operands, f32 accumulation.
    if use_fused_taps:
        # Small Cin: fold all K*K taps into one deep contraction.
        acc = jnp.dot(w_ref[...], im_ref[...].astype(jnp.bfloat16),
                      preferred_element_type=jnp.float32)
    else:
        # Large Cin: K*K lane-aligned matmuls over tap slices.
        acc = jnp.zeros((CoutT, HoWf), jnp.float32)
        for t in range(K * K):
            acc = acc + jnp.dot(
                w_ref[:, t * Cin:(t + 1) * Cin],
                im_ref[pl.ds(t * Cin, Cin), :].astype(jnp.bfloat16),
                preferred_element_type=jnp.float32)

    # Demodulate per output channel and store one lane-dense slab.
    o_ref[0] = (acc * d_ref[0]).astype(o_ref.dtype)


def modulated_conv(x, styles, w, gain):
    B, Cin, H, W = x.shape
    Cout, Cin_w, K, K2 = w.shape
    assert Cin == Cin_w and K == K2
    assert W >= K, "full-width-row trick needs W >= K"
    Ho, Wo = H - K + 1, W - K + 1            # padding=0 (module default)
    HW = H * W
    HoWf = Ho * W                            # full-width output rows
    KKCin = K * K * Cin

    # Cout tiling (MXU-friendly).  256 matches v6e/v7x systolic shape; 128 is
    # native on v5e.  TODO(synk): pick 128 on v5e via pltpu.get_tpu_info().
    if Cout % 256 == 0:
        CoutT = 256
    elif Cout % 128 == 0:
        CoutT = 128
    else:
        CoutT = Cout
    J = Cout // CoutT

    # Batch-invariant, tap-major, lane-dense weight in bf16 (MXU LHS):
    # w2[o, t*Cin + i] = w[o, i, kh, kw] with t = kh*K + kw.
    w2 = jnp.transpose(w, (0, 2, 3, 1)).reshape(Cout, KKCin).astype(jnp.bfloat16)

    # Per-sample modulation (Cin-wide) and demodulation (Cout-wide) scalars,
    # computed once in f32 on tiny arrays (no pass over x or the big weight).
    wsq = jnp.sum(jnp.square(w), axis=(2, 3))                     # (Cout, Cin)
    smod = gain * (styles.astype(jnp.float32) + 1.0)              # (B, Cin)
    dcoef = jax.lax.rsqrt(
        jnp.einsum("oc,bc->bo", wsq, smod * smod) + 1e-8)         # (B, Cout)
    sm_in = smod.reshape(B, Cin, 1)
    d_in = dcoef.reshape(B, Cout, 1)

    # x stays f32 in HBM; the flatten is a view (no pad / no extra HBM pass).
    xf = x.reshape(B, Cin, HW)

    use_fused_taps = Cin < 128
    kernel = functools.partial(_modconv_kernel, K=K, W=W,
                               use_fused_taps=use_fused_taps)

    # Advisory cost for the XLA scheduler.
    flops = 2 * B * Cout * KKCin * HoWf
    bytes_accessed = (xf.size * 4 + w2.size * 2 + sm_in.size * 4 +
                      d_in.size * 4 + B * Cout * HoWf * 4)

    # Realistic per-step VMEM budget (double-buffered pipelined blocks +
    # single im2col scratch), with headroom, capped at 48 MiB (v7x-safe).
    w_bufs = 1 if J == 1 else 2
    need = (2 * Cin * HW * 4 +                # x block, f32, double buffered
            w_bufs * CoutT * KKCin * 2 +      # weight block, bf16
            2 * Cin * 4 + 2 * CoutT * 4 +     # smod / dcoef blocks
            2 * CoutT * HoWf * 4 +            # output block, f32
            KKCin * HoWf * 4)                 # im2col scratch, f32
    vmem_limit = int(min(max(2 * need + (4 << 20), 8 << 20), 48 << 20))

    def run(single_buffer_w):
        if single_buffer_w:
            # Weight block index is constant across the grid when J == 1:
            # single-buffer it to reclaim the duplicate VMEM copy.
            w_spec = pl.BlockSpec((CoutT, KKCin), lambda b, j: (j, 0),
                                  pipeline_mode=pl.Buffered(1))
        else:
            w_spec = pl.BlockSpec((CoutT, KKCin), lambda b, j: (j, 0))
        return pl.pallas_call(
            kernel,
            out_shape=jax.ShapeDtypeStruct((B, Cout, HoWf), jnp.float32),
            grid_spec=pltpu.PrefetchScalarGridSpec(
                num_scalar_prefetch=0,
                grid=(B, J),
                in_specs=[
                    pl.BlockSpec((1, Cin, 1), lambda b, j: (b, 0, 0)),
                    pl.BlockSpec((1, CoutT, 1), lambda b, j: (b, j, 0)),
                    pl.BlockSpec((1, Cin, HW), lambda b, j: (b, 0, 0)),
                    w_spec,
                ],
                out_specs=pl.BlockSpec((1, CoutT, HoWf),
                                       lambda b, j: (b, j, 0)),
                scratch_shapes=[pltpu.VMEM((KKCin, HoWf), jnp.float32)],
            ),
            compiler_params=pltpu.CompilerParams(
                dimension_semantics=("parallel", "arbitrary"),
                vmem_limit_bytes=vmem_limit),
            cost_estimate=pl.CostEstimate(
                flops=int(flops), transcendentals=0,
                bytes_accessed=int(bytes_accessed)),
        )(sm_in, d_in, xf, w2)

    try:
        out_flat = run(single_buffer_w=(J == 1))
    except Exception:
        # Fallback for Pallas versions without pipeline_mode / Buffered(1).
        out_flat = run(single_buffer_w=False)

    # Drop the K-1 invalid "wrap" columns and restore NCHW.
    return out_flat.reshape(B, Cout, Ho, W)[:, :, :, :Wo]


def modulated_conv_reference(x, styles, w, gain):
    """Pure-JAX reference matching the PyTorch fused_modconv=True forward."""
    B = x.shape[0]
    wm = w[None] * gain * (styles[:, None, :, None, None] + 1.0)
    d = jax.lax.rsqrt(jnp.sum(wm ** 2, axis=(2, 3, 4)) + 1e-8)
    wm = wm * d[:, :, None, None, None]
    outs = []
    for b in range(B):
        out = jax.lax.conv_general_dilated(
            x[b:b + 1], wm[b], window_strides=(1, 1), padding="VALID",
            dimension_numbers=("NCHW", "OIHW", "NCHW"),
            precision=jax.lax.Precision.HIGHEST)
        outs.append(out)
    return jnp.concatenate(outs, axis=0)


if __name__ == "__main__":
    # Module hyper-params (defaults of ModulatedConv except chosen sizes).
    B, Cin, Cout, H, W, K = 2, 4, 8, 16, 16, 3
    lr_multiplier = 1.0
    gain = lr_multiplier / (Cout * Cin * K * K) ** 0.5

    key = jax.random.PRNGKey(0)
    kw_, kx_, ks_ = jax.random.split(key, 3)
    w = jax.random.normal(kw_, (Cout, Cin, K, K), jnp.float32) / lr_multiplier
    x = jax.random.normal(kx_, (B, Cin, H, W), jnp.float32)
    styles = jax.random.normal(ks_, (B, Cin), jnp.float32)

    out = modulated_conv(x, styles, w, gain)
    out = jax.block_until_ready(out)

    ref = modulated_conv_reference(x, styles, w, gain)
    assert out.shape == (B, Cout, H - K + 1, W - K + 1), out.shape
    # bf16 MXU operands (f32 accumulation) vs a Precision.HIGHEST f32
    # reference -> looser tolerance than the pure-f32 variant.
    err = float(jnp.max(jnp.abs(out - ref)))
    assert jnp.allclose(out, ref, rtol=5e-2, atol=5e-2), err

    print("KERNEL_OK")
</pallas_src>

<mosaic_0001>
module attributes {stable_mosaic.version = 11 : i64} {
  func.func @_modconv_kernel(%arg0: i32, %arg1: i32, %arg2: memref<1x4x1xf32, #tpu.memory_space<vmem>>, %arg3: memref<1x8x1xf32, #tpu.memory_space<vmem>>, %arg4: memref<1x4x256xf32, #tpu.memory_space<vmem>>, %arg5: memref<8x36xbf16, #tpu.memory_space<vmem>>, %arg6: memref<1x8x224xf32, #tpu.memory_space<vmem>>, %arg7: memref<36x224xf32, #tpu.memory_space<vmem>>) attributes {dimension_semantics = [#tpu.dimension_semantics<parallel>, #tpu.dimension_semantics<arbitrary>], iteration_bounds = array<i64: 2, 1>, scalar_prefetch = 0 : i64, scratch_operands = 1 : i64, tpu.core_type = #tpu.core_type<tc>, window_params = [{transform_indices = @transform_0, window_bounds = array<i64: 1, 4, 1>}, {transform_indices = @transform_1, window_bounds = array<i64: 1, 8, 1>}, {transform_indices = @transform_2, window_bounds = array<i64: 1, 4, 256>}, {pipeline_mode = #tpu.pipeline_mode<synchronous>, transform_indices = @transform_3, window_bounds = array<i64: 8, 36>}, {transform_indices = @transform_4, window_bounds = array<i64: 1, 8, 224>}]} {
    %c0_i32 = arith.constant 0 : i32
    %0 = arith.cmpi eq, %arg1, %c0_i32 : i32
    %1 = arith.extui %0 : i1 to i32
    %c0_i32_0 = arith.constant 0 : i32
    %2 = arith.cmpi ne, %1, %c0_i32_0 : i32
    scf.if %2 {
      %c0_10 = arith.constant 0 : index
      %c0_11 = arith.constant 0 : index
      %c0_12 = arith.constant 0 : index
      %14 = vector.load %arg2[%c0_10, %c0_11, %c0_12] : memref<1x4x1xf32, #tpu.memory_space<vmem>>, vector<1x4x1xf32>
      %15 = vector.shape_cast %14 : vector<1x4x1xf32> to vector<4x1xf32>
      %c0_13 = arith.constant 0 : index
      %c0_14 = arith.constant 0 : index
      %c0_15 = arith.constant 0 : index
      %16 = vector.load %arg4[%c0_13, %c0_14, %c0_15] : memref<1x4x256xf32, #tpu.memory_space<vmem>>, vector<1x4x224xf32>
      %17 = vector.shape_cast %16 : vector<1x4x224xf32> to vector<4x224xf32>
      %18 = vector.broadcast %15 : vector<4x1xf32> to vector<4x224xf32>
      %19 = arith.mulf %17, %18 : vector<4x224xf32>
      %c0_16 = arith.constant 0 : index
      %c0_17 = arith.constant 0 : index
      %20 = vector.load %arg7[%c0_16, %c0_17] : memref<36x224xf32, #tpu.memory_space<vmem>>, vector<4x224xf32>
      tpu.vector_store %arg7[%c0_16, %c0_17], %19 {strides = array<i32>} : memref<36x224xf32, #tpu.memory_space<vmem>>, vector<4x224xf32>,
      %c0_18 = arith.constant 0 : index
      %c0_19 = arith.constant 0 : index
      %c1 = arith.constant 1 : index
      %21 = vector.load %arg4[%c0_18, %c0_19, %c1] : memref<1x4x256xf32, #tpu.memory_space<vmem>>, vector<1x4x224xf32>
      %22 = vector.shape_cast %21 : vector<1x4x224xf32> to vector<4x224xf32>
      %23 = vector.broadcast %15 : vector<4x1xf32> to vector<4x224xf32>
      %24 = arith.mulf %22, %23 : vector<4x224xf32>
      %c4 = arith.constant 4 : index
      %c0_20 = arith.constant 0 : index
      %25 = vector.load %arg7[%c4, %c0_20] : memref<36x224xf32, #tpu.memory_space<vmem>>, vector<4x224xf32>
      tpu.vector_store %arg7[%c4, %c0_20], %24 {strides = array<i32>} : memref<36x224xf32, #tpu.memory_space<vmem>>, vector<4x224xf32>,
      %c0_21 = arith.constant 0 : index
      %c0_22 = arith.constant 0 : index
      %c2 = arith.constant 2 : index
      %26 = vector.load %arg4[%c0_21, %c0_22, %c2] : memref<1x4x256xf32, #tpu.memory_space<vmem>>, vector<1x4x224xf32>
      %27 = vector.shape_cast %26 : vector<1x4x224xf32> to vector<4x224xf32>
      %28 = vector.broadcast %15 : vector<4x1xf32> to vector<4x224xf32>
      %29 = arith.mulf %27, %28 : vector<4x224xf32>
      %c8 = arith.constant 8 : index
      %c0_23 = arith.constant 0 : index
      %30 = vector.load %arg7[%c8, %c0_23] : memref<36x224xf32, #tpu.memory_space<vmem>>, vector<4x224xf32>
      tpu.vector_store %arg7[%c8, %c0_23], %29 {strides = array<i32>} : memref<36x224xf32, #tpu.memory_space<vmem>>, vector<4x224xf32>,
      %c0_24 = arith.constant 0 : index
      %c0_25 = arith.constant 0 : index
      %c16 = arith.constant 16 : index
      %31 = vector.load %arg4[%c0_24, %c0_25, %c16] : memref<1x4x256xf32, #tpu.memory_space<vmem>>, vector<1x4x224xf32>
      %32 = vector.shape_cast %31 : vector<1x4x224xf32> to vector<4x224xf32>
      %33 = vector.broadcast %15 : vector<4x1xf32> to vector<4x224xf32>
      %34 = arith.mulf %32, %33 : vector<4x224xf32>
      %c12 = arith.constant 12 : index
      %c0_26 = arith.constant 0 : index
      %35 = vector.load %arg7[%c12, %c0_26] : memref<36x224xf32, #tpu.memory_space<vmem>>, vector<4x224xf32>
      tpu.vector_store %arg7[%c12, %c0_26], %34 {strides = array<i32>} : memref<36x224xf32, #tpu.memory_space<vmem>>, vector<4x224xf32>,
      %c0_27 = arith.constant 0 : index
      %c0_28 = arith.constant 0 : index
      %c17 = arith.constant 17 : index
      %36 = vector.load %arg4[%c0_27, %c0_28, %c17] : memref<1x4x256xf32, #tpu.memory_space<vmem>>, vector<1x4x224xf32>
      %37 = vector.shape_cast %36 : vector<1x4x224xf32> to vector<4x224xf32>
      %38 = vector.broadcast %15 : vector<4x1xf32> to vector<4x224xf32>
      %39 = arith.mulf %37, %38 : vector<4x224xf32>
      %c16_29 = arith.constant 16 : index
      %c0_30 = arith.constant 0 : index
      %40 = vector.load %arg7[%c16_29, %c0_30] : memref<36x224xf32, #tpu.memory_space<vmem>>, vector<4x224xf32>
      tpu.vector_store %arg7[%c16_29, %c0_30], %39 {strides = array<i32>} : memref<36x224xf32, #tpu.memory_space<vmem>>, vector<4x224xf32>,
      %c0_31 = arith.constant 0 : index
      %c0_32 = arith.constant 0 : index
      %c18 = arith.constant 18 : index
      %41 = vector.load %arg4[%c0_31, %c0_32, %c18] : memref<1x4x256xf32, #tpu.memory_space<vmem>>, vector<1x4x224xf32>
      %42 = vector.shape_cast %41 : vector<1x4x224xf32> to vector<4x224xf32>
      %43 = vector.broadcast %15 : vector<4x1xf32> to vector<4x224xf32>
      %44 = arith.mulf %42, %43 : vector<4x224xf32>
      %c20 = arith.constant 20 : index
      %c0_33 = arith.constant 0 : index
      %45 = vector.load %arg7[%c20, %c0_33] : memref<36x224xf32, #tpu.memory_space<vmem>>, vector<4x224xf32>
      tpu.vector_store %arg7[%c20, %c0_33], %44 {strides = array<i32>} : memref<36x224xf32, #tpu.memory_space<vmem>>, vector<4x224xf32>,
      %c0_34 = arith.constant 0 : index
      %c0_35 = arith.constant 0 : index
      %c32 = arith.constant 32 : index
      %46 = vector.load %arg4[%c0_34, %c0_35, %c32] : memref<1x4x256xf32, #tpu.memory_space<vmem>>, vector<1x4x224xf32>
      %47 = vector.shape_cast %46 : vector<1x4x224xf32> to vector<4x224xf32>
      %48 = vector.broadcast %15 : vector<4x1xf32> to vector<4x224xf32>
      %49 = arith.mulf %47, %48 : vector<4x224xf32>
      %c24 = arith.constant 24 : index
      %c0_36 = arith.constant 0 : index
      %50 = vector.load %arg7[%c24, %c0_36] : memref<36x224xf32, #tpu.memory_space<vmem>>, vector<4x224xf32>
      tpu.vector_store %arg7[%c24, %c0_36], %49 {strides = array<i32>} : memref<36x224xf32, #tpu.memory_space<vmem>>, vector<4x224xf32>,
      %c0_37 = arith.constant 0 : index
      %c0_38 = arith.constant 0 : index
      %c33 = arith.constant 33 : index
      %51 = vector.load %arg4[%c0_37, %c0_38, %c33] : memref<1x4x256xf32, #tpu.memory_space<vmem>>, vector<1x4x223xf32>
      %52 = vector.shape_cast %51 : vector<1x4x223xf32> to vector<4x223xf32>
      %53 = vector.broadcast %15 : vector<4x1xf32> to vector<4x223xf32>
      %54 = arith.mulf %52, %53 : vector<4x223xf32>
      %c28 = arith.constant 28 : index
      %c0_39 = arith.constant 0 : index
      %55 = vector.load %arg7[%c28, %c0_39] : memref<36x224xf32, #tpu.memory_space<vmem>>, vector<4x223xf32>
      tpu.vector_store %arg7[%c28, %c0_39], %54 {strides = array<i32>} : memref<36x224xf32, #tpu.memory_space<vmem>>, vector<4x223xf32>,
      %cst_40 = arith.constant 0.000000e+00 : f32
      %56 = vector.broadcast %cst_40 : f32 to vector<4x1xf32>
      %c28_41 = arith.constant 28 : index
      %c223 = arith.constant 223 : index
      %57 = vector.load %arg7[%c28_41, %c223] : memref<36x224xf32, #tpu.memory_space<vmem>>, vector<4x1xf32>
      tpu.vector_store %arg7[%c28_41, %c223], %56 {strides = array<i32>} : memref<36x224xf32, #tpu.memory_space<vmem>>, vector<4x1xf32>,
      %c0_42 = arith.constant 0 : index
      %c0_43 = arith.constant 0 : index
      %c34 = arith.constant 34 : index
      %58 = vector.load %arg4[%c0_42, %c0_43, %c34] : memref<1x4x256xf32, #tpu.memory_space<vmem>>, vector<1x4x222xf32>
      %59 = vector.shape_cast %58 : vector<1x4x222xf32> to vector<4x222xf32>
      %60 = vector.broadcast %15 : vector<4x1xf32> to vector<4x222xf32>
      %61 = arith.mulf %59, %60 : vector<4x222xf32>
      %c32_44 = arith.constant 32 : index
      %c0_45 = arith.constant 0 : index
      %62 = vector.load %arg7[%c32_44, %c0_45] : memref<36x224xf32, #tpu.memory_space<vmem>>, vector<4x222xf32>
      tpu.vector_store %arg7[%c32_44, %c0_45], %61 {strides = array<i32>} : memref<36x224xf32, #tpu.memory_space<vmem>>, vector<4x222xf32>,
      %cst_46 = arith.constant 0.000000e+00 : f32
      %63 = vector.broadcast %cst_46 : f32 to vector<4x2xf32>
      %c32_47 = arith.constant 32 : index
      %c222 = arith.constant 222 : index
      %64 = vector.load %arg7[%c32_47, %c222] : memref<36x224xf32, #tpu.memory_space<vmem>>, vector<4x2xf32>
      tpu.vector_store %arg7[%c32_47, %c222], %63 {strides = array<i32>} : memref<36x224xf32, #tpu.memory_space<vmem>>, vector<4x2xf32>,
    } else {
    }
    %c0 = arith.constant 0 : index
    %c0_1 = arith.constant 0 : index
    %3 = vector.load %arg5[%c0, %c0_1] : memref<8x36xbf16, #tpu.memory_space<vmem>>, vector<8x36xbf16>
    %c0_2 = arith.constant 0 : index
    %c0_3 = arith.constant 0 : index
    %4 = vector.load %arg7[%c0_2, %c0_3] : memref<36x224xf32, #tpu.memory_space<vmem>>, vector<36x224xf32>
    %5 = arith.truncf %4 : vector<36x224xf32> to vector<36x224xbf16>
    %cst = arith.constant dense<0.000000e+00> : vector<8x224xf32>
    %6 = tpu.matmul %3, %5, %cst {dimension_numbers = #tpu.dot_dimension_numbers<[1], [0], [0], [1], [0, 0, 1, 1], [], []>} : vector<8x36xbf16>, vector<36x224xbf16>, vector<8x224xf32> -> vector<8x224xf32>
    %c0_4 = arith.constant 0 : index
    %c0_5 = arith.constant 0 : index
    %c0_6 = arith.constant 0 : index
    %7 = vector.load %arg3[%c0_4, %c0_5, %c0_6] : memref<1x8x1xf32, #tpu.memory_space<vmem>>, vector<1x8x1xf32>
    %8 = vector.shape_cast %7 : vector<1x8x1xf32> to vector<8x1xf32>
    %9 = vector.broadcast %8 : vector<8x1xf32> to vector<8x224xf32>
    %10 = arith.mulf %6, %9 : vector<8x224xf32>
    %c0_7 = arith.constant 0 : index
    %c0_8 = arith.constant 0 : index
    %c0_9 = arith.constant 0 : index
    %11 = vector.load %arg6[%c0_7, %c0_8, %c0_9] : memref<1x8x224xf32, #tpu.memory_space<vmem>>, vector<1x8x224xf32>
    %12 = vector.shape_cast %11 : vector<1x8x224xf32> to vector<8x224xf32>
    %13 = vector.shape_cast %10 : vector<8x224xf32> to vector<1x8x224xf32>
    tpu.vector_store %arg6[%c0_7, %c0_8, %c0_9], %13 {strides = array<i32>} : memref<1x8x224xf32, #tpu.memory_space<vmem>>, vector<1x8x224xf32>,
    return
  }
  func.func @transform_0(%arg0: i32, %arg1: i32) -> (i32, i32, i32) {
    %c0_i32 = arith.constant 0 : i32
    %c0_i32_0 = arith.constant 0 : i32
    %c0_i32_1 = arith.constant 0 : i32
    return %arg0, %c0_i32, %c0_i32_0 : i32, i32, i32
  }
  func.func @transform_1(%arg0: i32, %arg1: i32) -> (i32, i32, i32) {
    %c0_i32 = arith.constant 0 : i32
    %c0_i32_0 = arith.constant 0 : i32
    return %arg0, %arg1, %c0_i32 : i32, i32, i32
  }
  func.func @transform_2(%arg0: i32, %arg1: i32) -> (i32, i32, i32) {
    %c0_i32 = arith.constant 0 : i32
    %c0_i32_0 = arith.constant 0 : i32
    %c0_i32_1 = arith.constant 0 : i32
    return %arg0, %c0_i32, %c0_i32_0 : i32, i32, i32
  }
  func.func @transform_3(%arg0: i32, %arg1: i32) -> (i32, i32) {
    %c0_i32 = arith.constant 0 : i32
    %c0_i32_0 = arith.constant 0 : i32
    return %arg1, %c0_i32 : i32, i32
  }
  func.func @transform_4(%arg0: i32, %arg1: i32) -> (i32, i32, i32) {
    %c0_i32 = arith.constant 0 : i32
    %c0_i32_0 = arith.constant 0 : i32
    return %arg0, %arg1, %c0_i32 : i32, i32, i32
  }
}

module attributes {stable_mosaic.version = 11 : i64} {
  func.func @_modconv_kernel(%arg0: i32, %arg1: i32, %arg2: memref<1x4x1xf32, #tpu.memory_space<vmem>>, %arg3: memref<1x8x1xf32, #tpu.memory_space<vmem>>, %arg4: memref<1x4x256xf32, #tpu.memory_space<vmem>>, %arg5: memref<8x36xbf16, #tpu.memory_space<vmem>>, %arg6: memref<1x8x224xf32, #tpu.memory_space<vmem>>, %arg7: memref<36x224xf32, #tpu.memory_space<vmem>>) attributes {dimension_semantics = [#tpu.dimension_semantics<parallel>, #tpu.dimension_semantics<arbitrary>], iteration_bounds = array<i64: 2, 1>, scalar_prefetch = 0 : i64, scratch_operands = 1 : i64, tpu.core_type = #tpu.core_type<tc>, window_params = [{transform_indices = @transform_0, window_bounds = array<i64: 1, 4, 1>}, {transform_indices = @transform_1, window_bounds = array<i64: 1, 8, 1>}, {transform_indices = @transform_2, window_bounds = array<i64: 1, 4, 256>}, {transform_indices = @transform_3, window_bounds = array<i64: 8, 36>}, {transform_indices = @transform_4, window_bounds = array<i64: 1, 8, 224>}]} {
    %c0_i32 = arith.constant 0 : i32
    %0 = arith.cmpi eq, %arg1, %c0_i32 : i32
    %1 = arith.extui %0 : i1 to i32
    %c0_i32_0 = arith.constant 0 : i32
    %2 = arith.cmpi ne, %1, %c0_i32_0 : i32
    scf.if %2 {
      %c0_10 = arith.constant 0 : index
      %c0_11 = arith.constant 0 : index
      %c0_12 = arith.constant 0 : index
      %14 = vector.load %arg2[%c0_10, %c0_11, %c0_12] : memref<1x4x1xf32, #tpu.memory_space<vmem>>, vector<1x4x1xf32>
      %15 = vector.shape_cast %14 : vector<1x4x1xf32> to vector<4x1xf32>
      %c0_13 = arith.constant 0 : index
      %c0_14 = arith.constant 0 : index
      %c0_15 = arith.constant 0 : index
      %16 = vector.load %arg4[%c0_13, %c0_14, %c0_15] : memref<1x4x256xf32, #tpu.memory_space<vmem>>, vector<1x4x224xf32>
      %17 = vector.shape_cast %16 : vector<1x4x224xf32> to vector<4x224xf32>
      %18 = vector.broadcast %15 : vector<4x1xf32> to vector<4x224xf32>
      %19 = arith.mulf %17, %18 : vector<4x224xf32>
      %c0_16 = arith.constant 0 : index
      %c0_17 = arith.constant 0 : index
      %20 = vector.load %arg7[%c0_16, %c0_17] : memref<36x224xf32, #tpu.memory_space<vmem>>, vector<4x224xf32>
      tpu.vector_store %arg7[%c0_16, %c0_17], %19 {strides = array<i32>} : memref<36x224xf32, #tpu.memory_space<vmem>>, vector<4x224xf32>,
      %c0_18 = arith.constant 0 : index
      %c0_19 = arith.constant 0 : index
      %c1 = arith.constant 1 : index
      %21 = vector.load %arg4[%c0_18, %c0_19, %c1] : memref<1x4x256xf32, #tpu.memory_space<vmem>>, vector<1x4x224xf32>
      %22 = vector.shape_cast %21 : vector<1x4x224xf32> to vector<4x224xf32>
      %23 = vector.broadcast %15 : vector<4x1xf32> to vector<4x224xf32>
      %24 = arith.mulf %22, %23 : vector<4x224xf32>
      %c4 = arith.constant 4 : index
      %c0_20 = arith.constant 0 : index
      %25 = vector.load %arg7[%c4, %c0_20] : memref<36x224xf32, #tpu.memory_space<vmem>>, vector<4x224xf32>
      tpu.vector_store %arg7[%c4, %c0_20], %24 {strides = array<i32>} : memref<36x224xf32, #tpu.memory_space<vmem>>, vector<4x224xf32>,
      %c0_21 = arith.constant 0 : index
      %c0_22 = arith.constant 0 : index
      %c2 = arith.constant 2 : index
      %26 = vector.load %arg4[%c0_21, %c0_22, %c2] : memref<1x4x256xf32, #tpu.memory_space<vmem>>, vector<1x4x224xf32>
      %27 = vector.shape_cast %26 : vector<1x4x224xf32> to vector<4x224xf32>
      %28 = vector.broadcast %15 : vector<4x1xf32> to vector<4x224xf32>
      %29 = arith.mulf %27, %28 : vector<4x224xf32>
      %c8 = arith.constant 8 : index
      %c0_23 = arith.constant 0 : index
      %30 = vector.load %arg7[%c8, %c0_23] : memref<36x224xf32, #tpu.memory_space<vmem>>, vector<4x224xf32>
      tpu.vector_store %arg7[%c8, %c0_23], %29 {strides = array<i32>} : memref<36x224xf32, #tpu.memory_space<vmem>>, vector<4x224xf32>,
      %c0_24 = arith.constant 0 : index
      %c0_25 = arith.constant 0 : index
      %c16 = arith.constant 16 : index
      %31 = vector.load %arg4[%c0_24, %c0_25, %c16] : memref<1x4x256xf32, #tpu.memory_space<vmem>>, vector<1x4x224xf32>
      %32 = vector.shape_cast %31 : vector<1x4x224xf32> to vector<4x224xf32>
      %33 = vector.broadcast %15 : vector<4x1xf32> to vector<4x224xf32>
      %34 = arith.mulf %32, %33 : vector<4x224xf32>
      %c12 = arith.constant 12 : index
      %c0_26 = arith.constant 0 : index
      %35 = vector.load %arg7[%c12, %c0_26] : memref<36x224xf32, #tpu.memory_space<vmem>>, vector<4x224xf32>
      tpu.vector_store %arg7[%c12, %c0_26], %34 {strides = array<i32>} : memref<36x224xf32, #tpu.memory_space<vmem>>, vector<4x224xf32>,
      %c0_27 = arith.constant 0 : index
      %c0_28 = arith.constant 0 : index
      %c17 = arith.constant 17 : index
      %36 = vector.load %arg4[%c0_27, %c0_28, %c17] : memref<1x4x256xf32, #tpu.memory_space<vmem>>, vector<1x4x224xf32>
      %37 = vector.shape_cast %36 : vector<1x4x224xf32> to vector<4x224xf32>
      %38 = vector.broadcast %15 : vector<4x1xf32> to vector<4x224xf32>
      %39 = arith.mulf %37, %38 : vector<4x224xf32>
      %c16_29 = arith.constant 16 : index
      %c0_30 = arith.constant 0 : index
      %40 = vector.load %arg7[%c16_29, %c0_30] : memref<36x224xf32, #tpu.memory_space<vmem>>, vector<4x224xf32>
      tpu.vector_store %arg7[%c16_29, %c0_30], %39 {strides = array<i32>} : memref<36x224xf32, #tpu.memory_space<vmem>>, vector<4x224xf32>,
      %c0_31 = arith.constant 0 : index
      %c0_32 = arith.constant 0 : index
      %c18 = arith.constant 18 : index
      %41 = vector.load %arg4[%c0_31, %c0_32, %c18] : memref<1x4x256xf32, #tpu.memory_space<vmem>>, vector<1x4x224xf32>
      %42 = vector.shape_cast %41 : vector<1x4x224xf32> to vector<4x224xf32>
      %43 = vector.broadcast %15 : vector<4x1xf32> to vector<4x224xf32>
      %44 = arith.mulf %42, %43 : vector<4x224xf32>
      %c20 = arith.constant 20 : index
      %c0_33 = arith.constant 0 : index
      %45 = vector.load %arg7[%c20, %c0_33] : memref<36x224xf32, #tpu.memory_space<vmem>>, vector<4x224xf32>
      tpu.vector_store %arg7[%c20, %c0_33], %44 {strides = array<i32>} : memref<36x224xf32, #tpu.memory_space<vmem>>, vector<4x224xf32>,
      %c0_34 = arith.constant 0 : index
      %c0_35 = arith.constant 0 : index
      %c32 = arith.constant 32 : index
      %46 = vector.load %arg4[%c0_34, %c0_35, %c32] : memref<1x4x256xf32, #tpu.memory_space<vmem>>, vector<1x4x224xf32>
      %47 = vector.shape_cast %46 : vector<1x4x224xf32> to vector<4x224xf32>
      %48 = vector.broadcast %15 : vector<4x1xf32> to vector<4x224xf32>
      %49 = arith.mulf %47, %48 : vector<4x224xf32>
      %c24 = arith.constant 24 : index
      %c0_36 = arith.constant 0 : index
      %50 = vector.load %arg7[%c24, %c0_36] : memref<36x224xf32, #tpu.memory_space<vmem>>, vector<4x224xf32>
      tpu.vector_store %arg7[%c24, %c0_36], %49 {strides = array<i32>} : memref<36x224xf32, #tpu.memory_space<vmem>>, vector<4x224xf32>,
      %c0_37 = arith.constant 0 : index
      %c0_38 = arith.constant 0 : index
      %c33 = arith.constant 33 : index
      %51 = vector.load %arg4[%c0_37, %c0_38, %c33] : memref<1x4x256xf32, #tpu.memory_space<vmem>>, vector<1x4x223xf32>
      %52 = vector.shape_cast %51 : vector<1x4x223xf32> to vector<4x223xf32>
      %53 = vector.broadcast %15 : vector<4x1xf32> to vector<4x223xf32>
      %54 = arith.mulf %52, %53 : vector<4x223xf32>
      %c28 = arith.constant 28 : index
      %c0_39 = arith.constant 0 : index
      %55 = vector.load %arg7[%c28, %c0_39] : memref<36x224xf32, #tpu.memory_space<vmem>>, vector<4x223xf32>
      tpu.vector_store %arg7[%c28, %c0_39], %54 {strides = array<i32>} : memref<36x224xf32, #tpu.memory_space<vmem>>, vector<4x223xf32>,
      %cst_40 = arith.constant 0.000000e+00 : f32
      %56 = vector.broadcast %cst_40 : f32 to vector<4x1xf32>
      %c28_41 = arith.constant 28 : index
      %c223 = arith.constant 223 : index
      %57 = vector.load %arg7[%c28_41, %c223] : memref<36x224xf32, #tpu.memory_space<vmem>>, vector<4x1xf32>
      tpu.vector_store %arg7[%c28_41, %c223], %56 {strides = array<i32>} : memref<36x224xf32, #tpu.memory_space<vmem>>, vector<4x1xf32>,
      %c0_42 = arith.constant 0 : index
      %c0_43 = arith.constant 0 : index
      %c34 = arith.constant 34 : index
      %58 = vector.load %arg4[%c0_42, %c0_43, %c34] : memref<1x4x256xf32, #tpu.memory_space<vmem>>, vector<1x4x222xf32>
      %59 = vector.shape_cast %58 : vector<1x4x222xf32> to vector<4x222xf32>
      %60 = vector.broadcast %15 : vector<4x1xf32> to vector<4x222xf32>
      %61 = arith.mulf %59, %60 : vector<4x222xf32>
      %c32_44 = arith.constant 32 : index
      %c0_45 = arith.constant 0 : index
      %62 = vector.load %arg7[%c32_44, %c0_45] : memref<36x224xf32, #tpu.memory_space<vmem>>, vector<4x222xf32>
      tpu.vector_store %arg7[%c32_44, %c0_45], %61 {strides = array<i32>} : memref<36x224xf32, #tpu.memory_space<vmem>>, vector<4x222xf32>,
      %cst_46 = arith.constant 0.000000e+00 : f32
      %63 = vector.broadcast %cst_46 : f32 to vector<4x2xf32>
      %c32_47 = arith.constant 32 : index
      %c222 = arith.constant 222 : index
      %64 = vector.load %arg7[%c32_47, %c222] : memref<36x224xf32, #tpu.memory_space<vmem>>, vector<4x2xf32>
      tpu.vector_store %arg7[%c32_47, %c222], %63 {strides = array<i32>} : memref<36x224xf32, #tpu.memory_space<vmem>>, vector<4x2xf32>,
    } else {
    }
    %c0 = arith.constant 0 : index
    %c0_1 = arith.constant 0 : index
    %3 = vector.load %arg5[%c0, %c0_1] : memref<8x36xbf16, #tpu.memory_space<vmem>>, vector<8x36xbf16>
    %c0_2 = arith.constant 0 : index
    %c0_3 = arith.constant 0 : index
    %4 = vector.load %arg7[%c0_2, %c0_3] : memref<36x224xf32, #tpu.memory_space<vmem>>, vector<36x224xf32>
    %5 = arith.truncf %4 : vector<36x224xf32> to vector<36x224xbf16>
    %cst = arith.constant dense<0.000000e+00> : vector<8x224xf32>
    %6 = tpu.matmul %3, %5, %cst {dimension_numbers = #tpu.dot_dimension_numbers<[1], [0], [0], [1], [0, 0, 1, 1], [], []>} : vector<8x36xbf16>, vector<36x224xbf16>, vector<8x224xf32> -> vector<8x224xf32>
    %c0_4 = arith.constant 0 : index
    %c0_5 = arith.constant 0 : index
    %c0_6 = arith.constant 0 : index
    %7 = vector.load %arg3[%c0_4, %c0_5, %c0_6] : memref<1x8x1xf32, #tpu.memory_space<vmem>>, vector<1x8x1xf32>
    %8 = vector.shape_cast %7 : vector<1x8x1xf32> to vector<8x1xf32>
    %9 = vector.broadcast %8 : vector<8x1xf32> to vector<8x224xf32>
    %10 = arith.mulf %6, %9 : vector<8x224xf32>
    %c0_7 = arith.constant 0 : index
    %c0_8 = arith.constant 0 : index
    %c0_9 = arith.constant 0 : index
    %11 = vector.load %arg6[%c0_7, %c0_8, %c0_9] : memref<1x8x224xf32, #tpu.memory_space<vmem>>, vector<1x8x224xf32>
    %12 = vector.shape_cast %11 : vector<1x8x224xf32> to vector<8x224xf32>
    %13 = vector.shape_cast %10 : vector<8x224xf32> to vector<1x8x224xf32>
    tpu.vector_store %arg6[%c0_7, %c0_8, %c0_9], %13 {strides = array<i32>} : memref<1x8x224xf32, #tpu.memory_space<vmem>>, vector<1x8x224xf32>,
    return
  }
  func.func @transform_0(%arg0: i32, %arg1: i32) -> (i32, i32, i32) {
    %c0_i32 = arith.constant 0 : i32
    %c0_i32_0 = arith.constant 0 : i32
    %c0_i32_1 = arith.constant 0 : i32
    return %arg0, %c0_i32, %c0_i32_0 : i32, i32, i32
  }
  func.func @transform_1(%arg0: i32, %arg1: i32) -> (i32, i32, i32) {
    %c0_i32 = arith.constant 0 : i32
    %c0_i32_0 = arith.constant 0 : i32
    return %arg0, %arg1, %c0_i32 : i32, i32, i32
  }
  func.func @transform_2(%arg0: i32, %arg1: i32) -> (i32, i32, i32) {
    %c0_i32 = arith.constant 0 : i32
    %c0_i32_0 = arith.constant 0 : i32
    %c0_i32_1 = arith.constant 0 : i32
    return %arg0, %c0_i32, %c0_i32_0 : i32, i32, i32
  }
  func.func @transform_3(%arg0: i32, %arg1: i32) -> (i32, i32) {
    %c0_i32 = arith.constant 0 : i32
    %c0_i32_0 = arith.constant 0 : i32
    return %arg1, %c0_i32 : i32, i32
  }
  func.func @transform_4(%arg0: i32, %arg1: i32) -> (i32, i32, i32) {
    %c0_i32 = arith.constant 0 : i32
    %c0_i32_0 = arith.constant 0 : i32
    return %arg0, %arg1, %c0_i32 : i32, i32, i32
  }
}

</mosaic_0001>

<llo_original>
// kernel: tpu_custom_call.1
$region0: #{tpu_custom_call.1}
  #allocation0 [shape = 'u32[]', space=smem, size = 0x4, offset = 0x4, fixed_abs, tag = 'smem constant byte address 0x4 - core index']
  #allocation1 [shape = 'u32[72,128]{1,0:T(1,128)}', space=vmem, size = 0x9000, scoped, tag = 'internal scratch']
  #allocation2 [shape = 'f32[36,224]{1,0:T(8,128)}', space=vmem, size = 0xa000, scoped, tag = 'scratch operand']
  %s0 = inlined_call_operand.vmem [shape: f32[2,4,1], index: 0, kind: input, shape index: {}]
  %s1 = inlined_call_operand.vmem [shape: f32[2,8,1], index: 1, kind: input, shape index: {}]
  %s2 = inlined_call_operand.vmem [shape: f32[2,4,256], index: 2, kind: input, shape index: {}]
  %s3 = inlined_call_operand.vmem [shape: bf16[8,36], index: 3, kind: input, shape index: {}]
  %s4 = inlined_call_operand.hbm [shape: f32[2,8,224], index: 4, kind: output, shape index: {}]
  %s5 = sld [smem:[#allocation0]]
  $region53: #{tpu_custom_call.1} parent=0
    _
  %s7 = ssub.s32 1, %s5
  %s8 = scalar_select 0, %s7, %s5
  $region1: #{tpu_custom_call.1} parent=0
    #allocation3 [shape = 'u8[16384]{0}', space=vmem, size = 0x4000, scoped, tag = 'output window, operand 0']
    #allocation4 [shape = 's32[2]{0}', space=sflag, size = 0x8, scoped, tag = 'scoped memory for tpu_custom_call.1']
    %9 = vsyncpa [#allocation4], 0
    %s10 = scalar_lea.sflag [#allocation4], 1
    %11 = vsyncpa %s10, 0
    loop: start=0, step=1, limit=4
    $region2: #{tpu_custom_call.1} parent=1 // loop_pre_header
      _
    $region3: #{tpu_custom_call.1} parent=1 // loop_header
      %s13 = sphi 0, %s17
      %p14 = scmp.ge.s32.totalorder %s13, 4
      %s20 = sphi 0, %s32
      %s21 = sphi 0, %s28
      %s22 = sphi 0, %s20
      %s23 = sphi 0, %s21
      %s24 = sphi 0, %s22
      %s25 = sphi 0, %s23
      %s35 = sphi 0, %s37
      %s38 = sphi 0, %s35
      %s39 = sphi 0, %s38
      %s55 = sphi 0, %s39
      %s63 = sphi 0, %s65
      %s66 = sphi 0, %s63
      %s67 = sphi 0, %s66
      %s83 = sphi 0, %s67
      %s89 = sphi 0, %s91
      %s92 = sphi 0, %s89
      %s93 = sphi 0, %s92
      %s109 = sphi 0, %s93
      %s115 = sphi 0, %s117
      %s118 = sphi 0, %s115
      %s119 = sphi 0, %s118
      %s135 = sphi 0, %s119
      %s143 = sphi 0, %s145
      %s146 = sphi 0, %s143
      %s147 = sphi 0, %s146
      %s163 = sphi 0, %s147
    $region4: #{tpu_custom_call.1} parent=1 // loop_header_branch
      %16 = sbr.rel (%p14) target = $region8
    $region5: #{tpu_custom_call.1} parent=1 // loop_body
      %s18 = ssub.s32 %s13, 1
      %s19 = ssub.s32 %s13, 2
      %s26 = sadd.s32 1, %s21
      %p27 = scmp.ge.s32.totalorder %s26, 1
      %s28 = scalar_select %p27, 0, %s26
      %s29 = sadd.s32 1, %s20
      %s30 = scalar_select %p27, %s29, %s20
      %p31 = scmp.ge.s32.totalorder %s30, 2
      %s32 = scalar_select %p31, 0, %s30
      %s33 = ssub.s32 %s20, %s32
      %p34 = scmp.eq.s32.totalorder %s33, 0
      %s36 = sadd.s32 %s35, 1
      %s37 = scalar_select %p34, %s35, %s36
      %p40 = pneg %p34
      %p41 = scmp.eq.s32.totalorder %s13, 1
      %p42 = por %p40, %p41
      %p43 = scmp.ne.s32.totalorder %s35, %s38
      %p44 = scmp.eq.s32.totalorder %s13, 0
      %p45 = por %p43, %p44
      %p46 = scmp.ne.s32.totalorder %s35, %s38
      %p47 = scmp.eq.s32.totalorder %s18, 1
      %p48 = por %p46, %p47
      %p49 = scmp.ne.s32.totalorder %s38, %s39
      %p50 = scmp.eq.s32.totalorder %s18, 0
      %p51 = por %p49, %p50
      %p52 = scmp.ne.s32.totalorder %s38, %s39
      %p53 = scmp.eq.s32.totalorder %s19, 1
      %p54 = por %p52, %p53
      %p56 = scmp.ne.s32.totalorder %s39, %s55
      %p57 = scmp.eq.s32.totalorder %s19, 0
      %p58 = por %p56, %p57
      %s59 = ssub.s32 %s20, %s32
      %s60 = ssub.s32 %s21, %s28
      %s61 = sor.u32 %s59, %s60
      %p62 = scmp.eq.s32.totalorder %s61, 0
      %s64 = sadd.s32 %s63, 1
      %s65 = scalar_select %p62, %s63, %s64
      %p68 = pneg %p62
      %p69 = scmp.eq.s32.totalorder %s13, 1
      %p70 = por %p68, %p69
      %p71 = scmp.ne.s32.totalorder %s63, %s66
      %p72 = scmp.eq.s32.totalorder %s13, 0
      %p73 = por %p71, %p72
      %p74 = scmp.ne.s32.totalorder %s63, %s66
      %p75 = scmp.eq.s32.totalorder %s18, 1
      %p76 = por %p74, %p75
      %p77 = scmp.ne.s32.totalorder %s66, %s67
      %p78 = scmp.eq.s32.totalorder %s18, 0
      %p79 = por %p77, %p78
      %p80 = scmp.ne.s32.totalorder %s66, %s67
      %p81 = scmp.eq.s32.totalorder %s19, 1
      %p82 = por %p80, %p81
      %p84 = scmp.ne.s32.totalorder %s67, %s83
      %p85 = scmp.eq.s32.totalorder %s19, 0
      %p86 = por %p84, %p85
      %s87 = ssub.s32 %s20, %s32
      %p88 = scmp.eq.s32.totalorder %s87, 0
      %s90 = sadd.s32 %s89, 1
      %s91 = scalar_select %p88, %s89, %s90
      %p94 = pneg %p88
      %p95 = scmp.eq.s32.totalorder %s13, 1
      %p96 = por %p94, %p95
      %p97 = scmp.ne.s32.totalorder %s89, %s92
      %p98 = scmp.eq.s32.totalorder %s13, 0
      %p99 = por %p97, %p98
      %p100 = scmp.ne.s32.totalorder %s89, %s92
      %p101 = scmp.eq.s32.totalorder %s18, 1
      %p102 = por %p100, %p101
      %p103 = scmp.ne.s32.totalorder %s92, %s93
      %p104 = scmp.eq.s32.totalorder %s18, 0
      %p105 = por %p103, %p104
      %p106 = scmp.ne.s32.totalorder %s92, %s93
      %p107 = scmp.eq.s32.totalorder %s19, 1
      %p108 = por %p106, %p107
      %p110 = scmp.ne.s32.totalorder %s93, %s109
      %p111 = scmp.eq.s32.totalorder %s19, 0
      %p112 = por %p110, %p111
      %s113 = ssub.s32 %s21, %s28
      %p114 = scmp.eq.s32.totalorder %s113, 0
      %s116 = sadd.s32 %s115, 1
      %s117 = scalar_select %p114, %s115, %s116
      %p120 = pneg %p114
      %p121 = scmp.eq.s32.totalorder %s13, 1
      %p122 = por %p120, %p121
      %p123 = scmp.ne.s32.totalorder %s115, %s118
      %p124 = scmp.eq.s32.totalorder %s13, 0
      %p125 = por %p123, %p124
      %p126 = scmp.ne.s32.totalorder %s115, %s118
      %p127 = scmp.eq.s32.totalorder %s18, 1
      %p128 = por %p126, %p127
      %p129 = scmp.ne.s32.totalorder %s118, %s119
      %p130 = scmp.eq.s32.totalorder %s18, 0
      %p131 = por %p129, %p130
      %p132 = scmp.ne.s32.totalorder %s118, %s119
      %p133 = scmp.eq.s32.totalorder %s19, 1
      %p134 = por %p132, %p133
      %p136 = scmp.ne.s32.totalorder %s119, %s135
      %p137 = scmp.eq.s32.totalorder %s19, 0
      %p138 = por %p136, %p137
      %s139 = ssub.s32 %s20, %s32
      %s140 = ssub.s32 %s21, %s28
      %s141 = sor.u32 %s139, %s140
      %p142 = scmp.eq.s32.totalorder %s141, 0
      %s144 = sadd.s32 %s143, 1
      %s145 = scalar_select %p142, %s143, %s144
      %p148 = pneg %p142
      %p149 = scmp.eq.s32.totalorder %s13, 1
      %p150 = por %p148, %p149
      %p151 = scmp.ne.s32.totalorder %s143, %s146
      %p152 = scmp.eq.s32.totalorder %s13, 0
      %p153 = por %p151, %p152
      %p154 = scmp.ne.s32.totalorder %s143, %s146
      %p155 = scmp.eq.s32.totalorder %s18, 1
      %p156 = por %p154, %p155
      %p157 = scmp.ne.s32.totalorder %s146, %s147
      %p158 = scmp.eq.s32.totalorder %s18, 0
      %p159 = por %p157, %p158
      %p160 = scmp.ne.s32.totalorder %s146, %s147
      %p161 = scmp.eq.s32.totalorder %s19, 1
      %p162 = por %p160, %p161
      %p164 = scmp.ne.s32.totalorder %s147, %s163
      %p165 = scmp.eq.s32.totalorder %s19, 0
      %p166 = por %p164, %p165
      %p167 = scmp.le.s32.totalorder 1, %s13
      %p168 = scmp.lt.s32.totalorder %s13, 3
      %p169 = pnand %p167, %p168
      %p170 = pneg %p169
      // Predicated region
      $region9: #{tpu_custom_call.1} parent=5 // pred_check
        _
      $region10: #{tpu_custom_call.1} parent=5 // pred_check_branch
        %172 = sbr.rel (%p169) target = $region12
      $region11: #{tpu_custom_call.1} parent=5 // pred_region
        %s173 = ssub.s32 %s13, 1
        // Predicated region
        $region13: #{tpu_custom_call.1} parent=11 // pred_check
          %p174 = pneg %p131
        $region14: #{tpu_custom_call.1} parent=11 // pred_check_branch
          %176 = sbr.rel (%p174) target = $region16
        $region15: #{tpu_custom_call.1} parent=11 // pred_region
          %p177 = scmp.lt.s32.totalorder %s23, 0
          %s178 = scalar_select %p177, %s23, 0
          %s179 = smul.addr %s178, 4
          %s180 = scalar_lea.vmem %s3, %s179
        $region16: #{tpu_custom_call.1} parent=11 // pred_fallthru
          _
      $region12: #{tpu_custom_call.1} parent=5 // pred_fallthru
        _
      %p181 = scmp.lt.s32.totalorder %s13, 2
      // Predicated region
      $region17: #{tpu_custom_call.1} parent=5 // pred_check
        %p182 = pneg %p181
      $region18: #{tpu_custom_call.1} parent=5 // pred_check_branch
        %184 = sbr.rel (%p182) target = $region20
      $region19: #{tpu_custom_call.1} parent=5 // pred_region
        // Predicated region
        $region21: #{tpu_custom_call.1} parent=19 // pred_check
          %p185 = pneg %p45
        $region22: #{tpu_custom_call.1} parent=19 // pred_check_branch
          %187 = sbr.rel (%p185) target = $region24
        $region23: #{tpu_custom_call.1} parent=19 // pred_region
          %p188 = scmp.lt.s32.totalorder %s20, 1
          %s189 = scalar_select %p188, %s20, 1
          %s190 = smul.addr %s189, 4
          %s191 = scalar_lea.vmem %s0, %s190
        $region24: #{tpu_custom_call.1} parent=19 // pred_fallthru
          _
        // Predicated region
        $region25: #{tpu_custom_call.1} parent=19 // pred_check
          %p192 = pneg %p73
        $region26: #{tpu_custom_call.1} parent=19 // pred_check_branch
          %194 = sbr.rel (%p192) target = $region28
        $region27: #{tpu_custom_call.1} parent=19 // pred_region
          %p195 = scmp.lt.s32.totalorder %s20, 1
          %s196 = scalar_select %p195, %s20, 1
          %p197 = scmp.lt.s32.totalorder %s21, 0
          %s198 = scalar_select %p197, %s21, 0
          %s199 = sadd.s32 %s198, %s196
          %s200 = smul.addr %s199, 8
          %s201 = scalar_lea.vmem %s1, %s200
        $region28: #{tpu_custom_call.1} parent=19 // pred_fallthru
          _
        // Predicated region
        $region29: #{tpu_custom_call.1} parent=19 // pred_check
          %p202 = pneg %p99
        $region30: #{tpu_custom_call.1} parent=19 // pred_check_branch
          %204 = sbr.rel (%p202) target = $region32
        $region31: #{tpu_custom_call.1} parent=19 // pred_region
          %p205 = scmp.lt.s32.totalorder %s20, 1
          %s206 = scalar_select %p205, %s20, 1
          %s207 = smul.addr %s206, 2
          %s208 = smul.addr %s207, 4
          %s209 = scalar_lea.vmem %s2, %s208
        $region32: #{tpu_custom_call.1} parent=19 // pred_fallthru
          _
      $region20: #{tpu_custom_call.1} parent=5 // pred_fallthru
        _
      %p210 = scmp.le.s32.totalorder 1, %s13
      %p211 = scmp.lt.s32.totalorder %s13, 3
      %p212 = pnand %p210, %p211
      %p213 = pneg %p212
      // Predicated region
      $region33: #{tpu_custom_call.1} parent=5 // pred_check
        _
      $region34: #{tpu_custom_call.1} parent=5 // pred_check_branch
        %215 = sbr.rel (%p212) target = $region36
      $region35: #{tpu_custom_call.1} parent=5 // pred_region
        %s216 = ssub.s32 %s13, 1
        %p217 = scmp.lt.s32.totalorder %s22, 1
        %s218 = scalar_select %p217, %s22, 1
        %s219 = smul.addr %s218, 4
        %s220 = scalar_lea.vmem %s0, %s219
        %p221 = pneg %p51
        %p222 = pneg %p48
        %p223 = scmp.lt.s32.totalorder %s22, 1
        %s224 = scalar_select %p223, %s22, 1
        %p225 = scmp.lt.s32.totalorder %s23, 0
        %s226 = scalar_select %p225, %s23, 0
        %s227 = sadd.s32 %s226, %s224
        %s228 = smul.addr %s227, 8
        %s229 = scalar_lea.vmem %s1, %s228
        %p230 = pneg %p79
        %p231 = pneg %p76
        %p232 = scmp.lt.s32.totalorder %s22, 1
        %s233 = scalar_select %p232, %s22, 1
        %s234 = smul.addr %s233, 2
        %s235 = smul.addr %s234, 4
        %s236 = scalar_lea.vmem %s2, %s235
        %p237 = pneg %p105
        %p238 = pneg %p102
        %p239 = scmp.lt.s32.totalorder %s23, 0
        %s240 = scalar_select %p239, %s23, 0
        %s241 = smul.addr %s240, 4
        %s242 = scalar_lea.vmem %s3, %s241
        %p243 = pneg %p131
        %p244 = pneg %p128
        %p245 = pneg %p159
        %p246 = pneg %p156
        %s247 = sand.u32 %s146, 1
        %s248 = scalar_lea.sflag [#allocation4], %s247
        %s249 = sand.u32 %s146, 1
        %s250 = smul.addr %s249, 16
        %s251 = scalar_lea.vmem [#allocation3], %s250
        %p252 = scmp.lt.s32.totalorder %s22, 1
        %s253 = scalar_select %p252, %s22, 1
        %s254 = smul.addr %s253, 4
        %s255 = scalar_lea.vmem %s0, %s254
        %p256 = scmp.lt.s32.totalorder %s22, 1
        %s257 = scalar_select %p256, %s22, 1
        %p258 = scmp.lt.s32.totalorder %s23, 0
        %s259 = scalar_select %p258, %s23, 0
        %s260 = sadd.s32 %s259, %s257
        %s261 = smul.addr %s260, 8
        %s262 = scalar_lea.vmem %s1, %s261
        %p263 = scmp.lt.s32.totalorder %s22, 1
        %s264 = scalar_select %p263, %s22, 1
        %s265 = smul.addr %s264, 2
        %s266 = smul.addr %s265, 4
        %s267 = scalar_lea.vmem %s2, %s266
        %p268 = scmp.lt.s32.totalorder %s23, 0
        %s269 = scalar_select %p268, %s23, 0
        %s270 = smul.addr %s269, 4
        %s271 = scalar_lea.vmem %s3, %s270
        %p273 = scmp.eq.s32.totalorder %s23, 0
        // Predicated region
        $region37: #{tpu_custom_call.1} parent=35 // pred_check
          %p274 = pneg %p273
        $region38: #{tpu_custom_call.1} parent=35 // pred_check_branch
          %276 = sbr.rel (%p274) target = $region40
        $region39: #{tpu_custom_call.1} parent=35 // pred_region
          %v277 = vld [vmem:[%s255] sm:$0xf]
          %v278 = vld [vmem:[%s267] sm:$0xff]
          %280 = vset.pattern.permute.xlu0 0
          %281 = vperm.xlu0 %280, %v277
          %v282 = vpop.permute.xlu0 %281
          %v284 = vunpack.c.l.s4 839922192
          %v285 = vunpack.c.0.s8 %v284
          %v286 = vperm.slane %v282, %v285
          %v288 = vmul.f32 %v278, %v286
          %290 = vst [vmem:[#allocation1] ss:$2 sm:$0xff] %v288
          %v291 = vld.sshfl [vmem:[#allocation1] sm:$0xff pattern:$0x75316420]
          %v292 = vld.sshfl [vmem:[#allocation1 + $0x8] sm:$0xff pattern:$0x75316420]
          %295 = vst [vmem:[#allocation2] sm:$0xf] %v291
          %vm296 = vcmask 781312
          %297 = vst.msk [vmem:[#allocation2 + $0x8] sm:$0xf] %vm296, %v292
          %v298 = vld [vmem:[%s267] sm:$0xff]
          %v299 = vmul.f32 %v298, %v286
          %s301 = scalar_lea.vmem [#allocation1], 1
          %302 = vst [vmem:[%s301] ss:$2 sm:$0xff] %v299
          %v303 = vld.sshfl [vmem:[#allocation1] sm:$0xff pattern:$0x75316420]
          %v304 = vld.sshfl [vmem:[#allocation1 + $0x8] sm:$0xff pattern:$0x75316420]
          %305 = vrot.lane.b32.xlu0 %v303, 127
          %v306 = vpop.permute.xlu0 %305
          %307 = vrot.lane.b32.xlu0 %v304, 127
          %v308 = vpop.permute.xlu0 %307
          %vm309 = vcmask 1039360
          %v310 = vsel %vm309, %v306, %v308
          %313 = vst [vmem:[#allocation2] sm:$0xf0] %v310
          %vm314 = vcmask 785412
          %315 = vst.msk [vmem:[#allocation2 + $0x8] sm:$0xf0] %vm314, %v308
          %v316 = vld [vmem:[%s267] sm:$0xff]
          %v317 = vmul.f32 %v316, %v286
          %319 = vst [vmem:[#allocation1] ss:$2 sm:$0xff] %v317
          %v320 = vld.sshfl [vmem:[#allocation1] sm:$0xff pattern:$0x75316420]
          %v321 = vld.sshfl [vmem:[#allocation1 + $0x8] sm:$0xff pattern:$0x75316420]
          %322 = vrot.lane.b32.xlu0 %v320, 126
          %v323 = vpop.permute.xlu0 %322
          %324 = vrot.lane.b32.xlu0 %v321, 126
          %v325 = vpop.permute.xlu0 %324
          %vm326 = vcmask 1031168
          %v327 = vsel %vm326, %v323, %v325
          %330 = vst [vmem:[#allocation2 + $0x10] sm:$0xf] %v327
          %331 = vst.msk [vmem:[#allocation2 + $0x18] sm:$0xf] %vm296, %v325
          %v332 = vld [vmem:[%s267] sm:$0xff]
          %v333 = vmul.f32 %v332, %v286
          %s335 = scalar_lea.vmem [#allocation1], 1
          %336 = vst [vmem:[%s335] ss:$2 sm:$0xff] %v333
          %v337 = vld.sshfl [vmem:[#allocation1] sm:$0xff pattern:$0x75316420]
          %v338 = vld.sshfl [vmem:[#allocation1 + $0x8] sm:$0xff pattern:$0x75316420]
          %339 = vrot.lane.b32.xlu0 %v337, 112
          %v340 = vpop.permute.xlu0 %339
          %341 = vrot.lane.b32.xlu0 %v338, 112
          %v342 = vpop.permute.xlu0 %341
          %vm343 = vcmask 916480
          %v344 = vsel %vm343, %v340, %v342
          %347 = vst [vmem:[#allocation2 + $0x10] sm:$0xf0] %v344
          %348 = vst.msk [vmem:[#allocation2 + $0x18] sm:$0xf0] %vm314, %v342
          %v349 = vld [vmem:[%s267] sm:$0xff]
          %v350 = vmul.f32 %v349, %v286
          %352 = vst [vmem:[#allocation1] ss:$2 sm:$0xff] %v350
          %v353 = vld.sshfl [vmem:[#allocation1] sm:$0xff pattern:$0x75316420]
          %v354 = vld.sshfl [vmem:[#allocation1 + $0x8] sm:$0xff pattern:$0x75316420]
          %355 = vrot.lane.b32.xlu0 %v353, 111
          %v356 = vpop.permute.xlu0 %355
          %357 = vrot.lane.b32.xlu0 %v354, 111
          %v358 = vpop.permute.xlu0 %357
          %vm359 = vcmask 908288
          %v360 = vsel %vm359, %v356, %v358
          %363 = vst [vmem:[#allocation2 + $0x20] sm:$0xf] %v360
          %364 = vst.msk [vmem:[#allocation2 + $0x28] sm:$0xf] %vm296, %v358
          %v365 = vld [vmem:[%s267] sm:$0xff]
          %v366 = vmul.f32 %v365, %v286
          %s368 = scalar_lea.vmem [#allocation1], 1
          %369 = vst [vmem:[%s368] ss:$2 sm:$0xff] %v366
          %v370 = vld.sshfl [vmem:[#allocation1] sm:$0xff pattern:$0x75316420]
          %v371 = vld.sshfl [vmem:[#allocation1 + $0x8] sm:$0xff pattern:$0x75316420]
          %372 = vrot.lane.b32.xlu0 %v370, 110
          %v373 = vpop.permute.xlu0 %372
          %374 = vrot.lane.b32.xlu0 %v371, 110
          %v375 = vpop.permute.xlu0 %374
          %vm376 = vcmask 900096
          %v377 = vsel %vm376, %v373, %v375
          %380 = vst [vmem:[#allocation2 + $0x20] sm:$0xf0] %v377
          %381 = vst.msk [vmem:[#allocation2 + $0x28] sm:$0xf0] %vm314, %v375
          %v382 = vld [vmem:[%s267] sm:$0xff]
          %v383 = vmul.f32 %v382, %v286
          %385 = vst [vmem:[#allocation1] ss:$2 sm:$0xff] %v383
          %v386 = vld.sshfl [vmem:[#allocation1] sm:$0xff pattern:$0x75316420]
          %v387 = vld.sshfl [vmem:[#allocation1 + $0x8] sm:$0xff pattern:$0x75316420]
          %388 = vrot.lane.b32.xlu0 %v386, 96
          %v389 = vpop.permute.xlu0 %388
          %390 = vrot.lane.b32.xlu0 %v387, 96
          %v391 = vpop.permute.xlu0 %390
          %vm392 = vcmask 785408
          %v393 = vsel %vm392, %v389, %v391
          %396 = vst [vmem:[#allocation2 + $0x30] sm:$0xf] %v393
          %397 = vst.msk [vmem:[#allocation2 + $0x38] sm:$0xf] %vm296, %v391
          %v398 = vld [vmem:[%s267] sm:$0xff]
          %v399 = vmul.f32 %v398, %v286
          %s401 = scalar_lea.vmem [#allocation1], 1
          %402 = vst [vmem:[%s401] ss:$2 sm:$0xff] %v399
          %v403 = vld.sshfl [vmem:[#allocation1] sm:$0xff pattern:$0x75316420]
          %v404 = vld.sshfl [vmem:[#allocation1 + $0x8] sm:$0xff pattern:$0x75316420]
          %405 = vrot.lane.b32.xlu0 %v403, 95
          %v406 = vpop.permute.xlu0 %405
          %407 = vrot.lane.b32.xlu0 %v404, 95
          %v408 = vpop.permute.xlu0 %407
          %vm409 = vcmask 777216
          %v410 = vsel %vm409, %v406, %v408
          %413 = vst [vmem:[#allocation2 + $0x30] sm:$0xf0] %v410
          %vm414 = vcmask 777220
          %415 = vst.msk [vmem:[#allocation2 + $0x38] sm:$0xf0] %vm414, %v408
          %vm416 = vcmask 786172
          %417 = vst.msk [vmem:[#allocation2 + $0x38] sm:$0xf0] %vm416, 0.0
          %v418 = vld [vmem:[%s267] sm:$0xff]
          %v419 = vmul.f32 %v418, %v286
          %421 = vst [vmem:[#allocation1] ss:$2 sm:$0xff] %v419
          %v422 = vld.sshfl [vmem:[#allocation1] sm:$0xff pattern:$0x75316420]
          %v423 = vld.sshfl [vmem:[#allocation1 + $0x8] sm:$0xff pattern:$0x75316420]
          %424 = vrot.lane.b32.xlu0 %v422, 94
          %v425 = vpop.permute.xlu0 %424
          %426 = vrot.lane.b32.xlu0 %v423, 94
          %v427 = vpop.permute.xlu0 %426
          %vm428 = vcmask 769024
          %v429 = vsel %vm428, %v425, %v427
          %432 = vst [vmem:[#allocation2 + $0x40] sm:$0xf] %v429
          %vm433 = vcmask 764928
          %434 = vst.msk [vmem:[#allocation2 + $0x48] sm:$0xf] %vm433, %v427
          %vm435 = vcmask 782064
          %436 = vst.msk [vmem:[#allocation2 + $0x48] sm:$0xf] %vm435, 0.0
        $region40: #{tpu_custom_call.1} parent=35 // pred_fallthru
          _
        %v437 = vld [vmem:[%s271] sm:$0xf]
        %v438 = vld [vmem:[#allocation2] sm:$0xff]
        %v439 = vld [vmem:[#allocation2 + $0x8] sm:$0xff]
        %v440 = vld [vmem:[#allocation2 + $0x10] sm:$0xff]
        %v441 = vld [vmem:[#allocation2 + $0x18] sm:$0xff]
        %v442 = vld [vmem:[#allocation2 + $0x20] sm:$0xff]
        %v443 = vld [vmem:[#allocation2 + $0x28] sm:$0xff]
        %v444 = vld [vmem:[#allocation2 + $0x30] sm:$0xff]
        %v445 = vld [vmem:[#allocation2 + $0x38] sm:$0xff]
        %v446 = vld [vmem:[#allocation2 + $0x40] sm:$0xf]
        %v447 = vld [vmem:[#allocation2 + $0x48] sm:$0xf]
        %v448 = vpack.c.bf16 %v440, %v438
        %v449 = vpack.c.bf16 %v441, %v439
        %v450 = vpack.c.bf16 %v444, %v442
        %v451 = vpack.c.bf16 %v445, %v443
        %v452 = vpack.c.bf16 %v446, %v446
        %v453 = vpack.c.bf16 %v447, %v447
        %vm454 = vcmask 293888
        %v456 = vsel %vm454, %v437, 0
        %vm458 = vcmask 1041408
        %v460 = vsel %vm458, %v452, 0
        %v463 = vsel %vm458, %v453, 0
        %465 = vmatpush.bf16.msra.mxu0 0
        %466 = vmatpush.bf16.msra.mxu0 0
        %467 = vmatpush.bf16.msra.mxu0 0
        %468 = vmatpush.bf16.msra.mxu0 0
        %469 = vmatpush.bf16.msra.mxu0 0
        %470 = vmatpush.bf16.msra.mxu0 %v460
        %471 = vmatpush.bf16.msra.mxu0 %v450
        %472 = vmatpush.bf16.msra.mxu0 %v448
        %473 = vmatmul.bf16.gmra.mxu0 %v456
        %v474 = vpop.f32.mrf.mxu0
        %v475 = vadd.f32 0.0, %v474
        %v476 = vpop.f32.mrf.mxu0
        %477 = vdwg.mxu0
        %478 = vmatpush.bf16.msra.mxu0 0
        %479 = vmatpush.bf16.msra.mxu0 0
        %480 = vmatpush.bf16.msra.mxu0 0
        %481 = vmatpush.bf16.msra.mxu0 0
        %482 = vmatpush.bf16.msra.mxu0 0
        %483 = vmatpush.bf16.msra.mxu0 %v463
        %484 = vmatpush.bf16.msra.mxu0 %v451
        %485 = vmatpush.bf16.msra.mxu0 %v449
        %486 = vmatmul.bf16.gmra.mxu0 %v456
        %v487 = vpop.f32.mrf.mxu0
        %v488 = vadd.f32 0.0, %v487
        %v489 = vpop.f32.mrf.mxu0
        %490 = vdwg.mxu0
        %v491 = vld [vmem:[%s262] sm:$0xff]
        %493 = vset.pattern.permute.xlu0 0
        %494 = vperm.xlu0 %493, %v491
        %v495 = vpop.permute.xlu0 %494
        %v497 = vmul.f32 %v475, %v495
        %v498 = vmul.f32 %v488, %v495
        %499 = vst [vmem:[%s251] sm:$0xff] %v497
        %vm500 = vcmask 785408
        %501 = vst.msk [vmem:[%s251 + $0x8] sm:$0xff] %vm500, %v498
        %s502 = sand.u32 %s146, 1
        %s503 = scalar_lea.sflag [#allocation4], %s502
        %s504 = sand.u32 %s146, 1
        %s505 = smul.addr %s504, 16
        %s506 = scalar_lea.vmem [#allocation3], %s505
        // Predicated region
        $region41: #{tpu_custom_call.1} parent=35 // pred_check
          %p507 = pneg %p156
        $region42: #{tpu_custom_call.1} parent=35 // pred_check_branch
          %509 = sbr.rel (%p507) target = $region44
        $region43: #{tpu_custom_call.1} parent=35 // pred_region
          %511 = vsyncadd %s503, 0
          %s512 = smul.addr %s23, 2
          %s513 = smul.addr %s22, 2
          %s514 = sadd.s32 %s512, %s513
          %s515 = smul.addr %s514, 8
          %s516 = scalar_lea.hbm %s4, %s515
          %s518 = sshll.u32 %s506, 4
          %s519 = int_to_ptr.vmem [resolvable:$true] %s518
          %s520 = sshll.u32 %s516, 4
          %s521 = int_to_ptr.hbm [resolvable:$true] %s520
          %523 = dma.vmem_to_hbm [thread:$0]  %s519, 256, %s521, %s503
        $region44: #{tpu_custom_call.1} parent=35 // pred_fallthru
          _
      $region36: #{tpu_custom_call.1} parent=5 // pred_fallthru
        _
      %p524 = scmp.le.s32.totalorder 2, %s13
      // Predicated region
      $region45: #{tpu_custom_call.1} parent=5 // pred_check
        %p525 = pneg %p524
      $region46: #{tpu_custom_call.1} parent=5 // pred_check_branch
        %527 = sbr.rel (%p525) target = $region48
      $region47: #{tpu_custom_call.1} parent=5 // pred_region
        %s528 = ssub.s32 %s13, 2
        // Predicated region
        $region49: #{tpu_custom_call.1} parent=47 // pred_check
          %p529 = pneg %p162
        $region50: #{tpu_custom_call.1} parent=47 // pred_check_branch
          %531 = sbr.rel (%p529) target = $region52
        $region51: #{tpu_custom_call.1} parent=47 // pred_region
          %s532 = sand.u32 %s147, 1
          %s533 = scalar_lea.sflag [#allocation4], %s532
          %s534 = sand.u32 %s147, 1
          %s535 = smul.addr %s534, 16
          %s536 = scalar_lea.vmem [#allocation3], %s535
          %538 = dma.done %s533, 256
        $region52: #{tpu_custom_call.1} parent=47 // pred_fallthru
          _
      $region48: #{tpu_custom_call.1} parent=5 // pred_fallthru
        _
    $region6: #{tpu_custom_call.1} parent=1 // loop_footer
      %s17 = sadd.s32 1, %s13
    $region7: #{tpu_custom_call.1} parent=1 // loop_footer_branch
      %12 = sbr.rel target = $region3
    $region8: #{tpu_custom_call.1} parent=1 // loop_exit
      _
    %539 = vsyncpa [#allocation4], 1
    %s540 = scalar_lea.sflag [#allocation4], 1
    %541 = vsyncpa %s540, 1

// kernel: tpu_custom_call.1
$region0: #{tpu_custom_call.1}
  #allocation0 [shape = 'u32[]', space=smem, size = 0x4, offset = 0x4, fixed_abs, tag = 'smem constant byte address 0x4 - core index']
  #allocation1 [shape = 'u32[72,128]{1,0:T(1,128)}', space=vmem, size = 0x9000, scoped, tag = 'internal scratch']
  #allocation2 [shape = 'f32[36,224]{1,0:T(8,128)}', space=vmem, size = 0xa000, scoped, tag = 'scratch operand']
  %s0 = inlined_call_operand.vmem [shape: f32[2,4,1], index: 0, kind: input, shape index: {}]
  %s1 = inlined_call_operand.vmem [shape: f32[2,8,1], index: 1, kind: input, shape index: {}]
  %s2 = inlined_call_operand.vmem [shape: f32[2,4,256], index: 2, kind: input, shape index: {}]
  %s3 = inlined_call_operand.vmem [shape: bf16[8,36], index: 3, kind: input, shape index: {}]
  %s4 = inlined_call_operand.hbm [shape: f32[2,8,224], index: 4, kind: output, shape index: {}]
  %s5 = sld [smem:[#allocation0]]
  $region53: #{tpu_custom_call.1} parent=0
    _
  %s7 = ssub.s32 1, %s5
  %s8 = scalar_select 0, %s7, %s5
  $region1: #{tpu_custom_call.1} parent=0
    #allocation3 [shape = 'u8[16384]{0}', space=vmem, size = 0x4000, scoped, tag = 'output window, operand 0']
    #allocation4 [shape = 's32[2]{0}', space=sflag, size = 0x8, scoped, tag = 'scoped memory for tpu_custom_call.1']
    %9 = vsyncpa [#allocation4], 0
    %s10 = scalar_lea.sflag [#allocation4], 1
    %11 = vsyncpa %s10, 0
    loop: start=0, step=1, limit=4
    $region2: #{tpu_custom_call.1} parent=1 // loop_pre_header
      _
    $region3: #{tpu_custom_call.1} parent=1 // loop_header
      %s13 = sphi 0, %s17
      %p14 = scmp.ge.s32.totalorder %s13, 4
      %s20 = sphi 0, %s32
      %s21 = sphi 0, %s28
      %s22 = sphi 0, %s20
      %s23 = sphi 0, %s21
      %s24 = sphi 0, %s22
      %s25 = sphi 0, %s23
      %s35 = sphi 0, %s37
      %s38 = sphi 0, %s35
      %s39 = sphi 0, %s38
      %s55 = sphi 0, %s39
      %s63 = sphi 0, %s65
      %s66 = sphi 0, %s63
      %s67 = sphi 0, %s66
      %s83 = sphi 0, %s67
      %s89 = sphi 0, %s91
      %s92 = sphi 0, %s89
      %s93 = sphi 0, %s92
      %s109 = sphi 0, %s93
      %s115 = sphi 0, %s117
      %s118 = sphi 0, %s115
      %s119 = sphi 0, %s118
      %s135 = sphi 0, %s119
      %s143 = sphi 0, %s145
      %s146 = sphi 0, %s143
      %s147 = sphi 0, %s146
      %s163 = sphi 0, %s147
    $region4: #{tpu_custom_call.1} parent=1 // loop_header_branch
      %16 = sbr.rel (%p14) target = $region8
    $region5: #{tpu_custom_call.1} parent=1 // loop_body
      %s18 = ssub.s32 %s13, 1
      %s19 = ssub.s32 %s13, 2
      %s26 = sadd.s32 1, %s21
      %p27 = scmp.ge.s32.totalorder %s26, 1
      %s28 = scalar_select %p27, 0, %s26
      %s29 = sadd.s32 1, %s20
      %s30 = scalar_select %p27, %s29, %s20
      %p31 = scmp.ge.s32.totalorder %s30, 2
      %s32 = scalar_select %p31, 0, %s30
      %s33 = ssub.s32 %s20, %s32
      %p34 = scmp.eq.s32.totalorder %s33, 0
      %s36 = sadd.s32 %s35, 1
      %s37 = scalar_select %p34, %s35, %s36
      %p40 = pneg %p34
      %p41 = scmp.eq.s32.totalorder %s13, 1
      %p42 = por %p40, %p41
      %p43 = scmp.ne.s32.totalorder %s35, %s38
      %p44 = scmp.eq.s32.totalorder %s13, 0
      %p45 = por %p43, %p44
      %p46 = scmp.ne.s32.totalorder %s35, %s38
      %p47 = scmp.eq.s32.totalorder %s18, 1
      %p48 = por %p46, %p47
      %p49 = scmp.ne.s32.totalorder %s38, %s39
      %p50 = scmp.eq.s32.totalorder %s18, 0
      %p51 = por %p49, %p50
      %p52 = scmp.ne.s32.totalorder %s38, %s39
      %p53 = scmp.eq.s32.totalorder %s19, 1
      %p54 = por %p52, %p53
      %p56 = scmp.ne.s32.totalorder %s39, %s55
      %p57 = scmp.eq.s32.totalorder %s19, 0
      %p58 = por %p56, %p57
      %s59 = ssub.s32 %s20, %s32
      %s60 = ssub.s32 %s21, %s28
      %s61 = sor.u32 %s59, %s60
      %p62 = scmp.eq.s32.totalorder %s61, 0
      %s64 = sadd.s32 %s63, 1
      %s65 = scalar_select %p62, %s63, %s64
      %p68 = pneg %p62
      %p69 = scmp.eq.s32.totalorder %s13, 1
      %p70 = por %p68, %p69
      %p71 = scmp.ne.s32.totalorder %s63, %s66
      %p72 = scmp.eq.s32.totalorder %s13, 0
      %p73 = por %p71, %p72
      %p74 = scmp.ne.s32.totalorder %s63, %s66
      %p75 = scmp.eq.s32.totalorder %s18, 1
      %p76 = por %p74, %p75
      %p77 = scmp.ne.s32.totalorder %s66, %s67
      %p78 = scmp.eq.s32.totalorder %s18, 0
      %p79 = por %p77, %p78
      %p80 = scmp.ne.s32.totalorder %s66, %s67
      %p81 = scmp.eq.s32.totalorder %s19, 1
      %p82 = por %p80, %p81
      %p84 = scmp.ne.s32.totalorder %s67, %s83
      %p85 = scmp.eq.s32.totalorder %s19, 0
      %p86 = por %p84, %p85
      %s87 = ssub.s32 %s20, %s32
      %p88 = scmp.eq.s32.totalorder %s87, 0
      %s90 = sadd.s32 %s89, 1
      %s91 = scalar_select %p88, %s89, %s90
      %p94 = pneg %p88
      %p95 = scmp.eq.s32.totalorder %s13, 1
      %p96 = por %p94, %p95
      %p97 = scmp.ne.s32.totalorder %s89, %s92
      %p98 = scmp.eq.s32.totalorder %s13, 0
      %p99 = por %p97, %p98
      %p100 = scmp.ne.s32.totalorder %s89, %s92
      %p101 = scmp.eq.s32.totalorder %s18, 1
      %p102 = por %p100, %p101
      %p103 = scmp.ne.s32.totalorder %s92, %s93
      %p104 = scmp.eq.s32.totalorder %s18, 0
      %p105 = por %p103, %p104
      %p106 = scmp.ne.s32.totalorder %s92, %s93
      %p107 = scmp.eq.s32.totalorder %s19, 1
      %p108 = por %p106, %p107
      %p110 = scmp.ne.s32.totalorder %s93, %s109
      %p111 = scmp.eq.s32.totalorder %s19, 0
      %p112 = por %p110, %p111
      %s113 = ssub.s32 %s21, %s28
      %p114 = scmp.eq.s32.totalorder %s113, 0
      %s116 = sadd.s32 %s115, 1
      %s117 = scalar_select %p114, %s115, %s116
      %p120 = pneg %p114
      %p121 = scmp.eq.s32.totalorder %s13, 1
      %p122 = por %p120, %p121
      %p123 = scmp.ne.s32.totalorder %s115, %s118
      %p124 = scmp.eq.s32.totalorder %s13, 0
      %p125 = por %p123, %p124
      %p126 = scmp.ne.s32.totalorder %s115, %s118
      %p127 = scmp.eq.s32.totalorder %s18, 1
      %p128 = por %p126, %p127
      %p129 = scmp.ne.s32.totalorder %s118, %s119
      %p130 = scmp.eq.s32.totalorder %s18, 0
      %p131 = por %p129, %p130
      %p132 = scmp.ne.s32.totalorder %s118, %s119
      %p133 = scmp.eq.s32.totalorder %s19, 1
      %p134 = por %p132, %p133
      %p136 = scmp.ne.s32.totalorder %s119, %s135
      %p137 = scmp.eq.s32.totalorder %s19, 0
      %p138 = por %p136, %p137
      %s139 = ssub.s32 %s20, %s32
      %s140 = ssub.s32 %s21, %s28
      %s141 = sor.u32 %s139, %s140
      %p142 = scmp.eq.s32.totalorder %s141, 0
      %s144 = sadd.s32 %s143, 1
      %s145 = scalar_select %p142, %s143, %s144
      %p148 = pneg %p142
      %p149 = scmp.eq.s32.totalorder %s13, 1
      %p150 = por %p148, %p149
      %p151 = scmp.ne.s32.totalorder %s143, %s146
      %p152 = scmp.eq.s32.totalorder %s13, 0
      %p153 = por %p151, %p152
      %p154 = scmp.ne.s32.totalorder %s143, %s146
      %p155 = scmp.eq.s32.totalorder %s18, 1
      %p156 = por %p154, %p155
      %p157 = scmp.ne.s32.totalorder %s146, %s147
      %p158 = scmp.eq.s32.totalorder %s18, 0
      %p159 = por %p157, %p158
      %p160 = scmp.ne.s32.totalorder %s146, %s147
      %p161 = scmp.eq.s32.totalorder %s19, 1
      %p162 = por %p160, %p161
      %p164 = scmp.ne.s32.totalorder %s147, %s163
      %p165 = scmp.eq.s32.totalorder %s19, 0
      %p166 = por %p164, %p165
      %p167 = scmp.le.s32.totalorder 1, %s13
      %p168 = scmp.lt.s32.totalorder %s13, 3
      %p169 = pnand %p167, %p168
      %p170 = pneg %p169
      // Predicated region
      $region9: #{tpu_custom_call.1} parent=5 // pred_check
        _
      $region10: #{tpu_custom_call.1} parent=5 // pred_check_branch
        %172 = sbr.rel (%p169) target = $region12
      $region11: #{tpu_custom_call.1} parent=5 // pred_region
        %s173 = ssub.s32 %s13, 1
        // Predicated region
        $region13: #{tpu_custom_call.1} parent=11 // pred_check
          %p174 = pneg %p131
        $region14: #{tpu_custom_call.1} parent=11 // pred_check_branch
          %176 = sbr.rel (%p174) target = $region16
        $region15: #{tpu_custom_call.1} parent=11 // pred_region
          %p177 = scmp.lt.s32.totalorder %s23, 0
          %s178 = scalar_select %p177, %s23, 0
          %s179 = smul.addr %s178, 4
          %s180 = scalar_lea.vmem %s3, %s179
        $region16: #{tpu_custom_call.1} parent=11 // pred_fallthru
          _
      $region12: #{tpu_custom_call.1} parent=5 // pred_fallthru
        _
      %p181 = scmp.lt.s32.totalorder %s13, 2
      // Predicated region
      $region17: #{tpu_custom_call.1} parent=5 // pred_check
        %p182 = pneg %p181
      $region18: #{tpu_custom_call.1} parent=5 // pred_check_branch
        %184 = sbr.rel (%p182) target = $region20
      $region19: #{tpu_custom_call.1} parent=5 // pred_region
        // Predicated region
        $region21: #{tpu_custom_call.1} parent=19 // pred_check
          %p185 = pneg %p45
        $region22: #{tpu_custom_call.1} parent=19 // pred_check_branch
          %187 = sbr.rel (%p185) target = $region24
        $region23: #{tpu_custom_call.1} parent=19 // pred_region
          %p188 = scmp.lt.s32.totalorder %s20, 1
          %s189 = scalar_select %p188, %s20, 1
          %s190 = smul.addr %s189, 4
          %s191 = scalar_lea.vmem %s0, %s190
        $region24: #{tpu_custom_call.1} parent=19 // pred_fallthru
          _
        // Predicated region
        $region25: #{tpu_custom_call.1} parent=19 // pred_check
          %p192 = pneg %p73
        $region26: #{tpu_custom_call.1} parent=19 // pred_check_branch
          %194 = sbr.rel (%p192) target = $region28
        $region27: #{tpu_custom_call.1} parent=19 // pred_region
          %p195 = scmp.lt.s32.totalorder %s20, 1
          %s196 = scalar_select %p195, %s20, 1
          %p197 = scmp.lt.s32.totalorder %s21, 0
          %s198 = scalar_select %p197, %s21, 0
          %s199 = sadd.s32 %s198, %s196
          %s200 = smul.addr %s199, 8
          %s201 = scalar_lea.vmem %s1, %s200
        $region28: #{tpu_custom_call.1} parent=19 // pred_fallthru
          _
        // Predicated region
        $region29: #{tpu_custom_call.1} parent=19 // pred_check
          %p202 = pneg %p99
        $region30: #{tpu_custom_call.1} parent=19 // pred_check_branch
          %204 = sbr.rel (%p202) target = $region32
        $region31: #{tpu_custom_call.1} parent=19 // pred_region
          %p205 = scmp.lt.s32.totalorder %s20, 1
          %s206 = scalar_select %p205, %s20, 1
          %s207 = smul.addr %s206, 2
          %s208 = smul.addr %s207, 4
          %s209 = scalar_lea.vmem %s2, %s208
        $region32: #{tpu_custom_call.1} parent=19 // pred_fallthru
          _
      $region20: #{tpu_custom_call.1} parent=5 // pred_fallthru
        _
      %p210 = scmp.le.s32.totalorder 1, %s13
      %p211 = scmp.lt.s32.totalorder %s13, 3
      %p212 = pnand %p210, %p211
      %p213 = pneg %p212
      // Predicated region
      $region33: #{tpu_custom_call.1} parent=5 // pred_check
        _
      $region34: #{tpu_custom_call.1} parent=5 // pred_check_branch
        %215 = sbr.rel (%p212) target = $region36
      $region35: #{tpu_custom_call.1} parent=5 // pred_region
        %s216 = ssub.s32 %s13, 1
        %p217 = scmp.lt.s32.totalorder %s22, 1
        %s218 = scalar_select %p217, %s22, 1
        %s219 = smul.addr %s218, 4
        %s220 = scalar_lea.vmem %s0, %s219
        %p221 = pneg %p51
        %p222 = pneg %p48
        %p223 = scmp.lt.s32.totalorder %s22, 1
        %s224 = scalar_select %p223, %s22, 1
        %p225 = scmp.lt.s32.totalorder %s23, 0
        %s226 = scalar_select %p225, %s23, 0
        %s227 = sadd.s32 %s226, %s224
        %s228 = smul.addr %s227, 8
        %s229 = scalar_lea.vmem %s1, %s228
        %p230 = pneg %p79
        %p231 = pneg %p76
        %p232 = scmp.lt.s32.totalorder %s22, 1
        %s233 = scalar_select %p232, %s22, 1
        %s234 = smul.addr %s233, 2
        %s235 = smul.addr %s234, 4
        %s236 = scalar_lea.vmem %s2, %s235
        %p237 = pneg %p105
        %p238 = pneg %p102
        %p239 = scmp.lt.s32.totalorder %s23, 0
        %s240 = scalar_select %p239, %s23, 0
        %s241 = smul.addr %s240, 4
        %s242 = scalar_lea.vmem %s3, %s241
        %p243 = pneg %p131
        %p244 = pneg %p128
        %p245 = pneg %p159
        %p246 = pneg %p156
        %s247 = sand.u32 %s146, 1
        %s248 = scalar_lea.sflag [#allocation4], %s247
        %s249 = sand.u32 %s146, 1
        %s250 = smul.addr %s249, 16
        %s251 = scalar_lea.vmem [#allocation3], %s250
        %p252 = scmp.lt.s32.totalorder %s22, 1
        %s253 = scalar_select %p252, %s22, 1
        %s254 = smul.addr %s253, 4
        %s255 = scalar_lea.vmem %s0, %s254
        %p256 = scmp.lt.s32.totalorder %s22, 1
        %s257 = scalar_select %p256, %s22, 1
        %p258 = scmp.lt.s32.totalorder %s23, 0
        %s259 = scalar_select %p258, %s23, 0
        %s260 = sadd.s32 %s259, %s257
        %s261 = smul.addr %s260, 8
        %s262 = scalar_lea.vmem %s1, %s261
        %p263 = scmp.lt.s32.totalorder %s22, 1
        %s264 = scalar_select %p263, %s22, 1
        %s265 = smul.addr %s264, 2
        %s266 = smul.addr %s265, 4
        %s267 = scalar_lea.vmem %s2, %s266
        %p268 = scmp.lt.s32.totalorder %s23, 0
        %s269 = scalar_select %p268, %s23, 0
        %s270 = smul.addr %s269, 4
        %s271 = scalar_lea.vmem %s3, %s270
        %p273 = scmp.eq.s32.totalorder %s23, 0
        // Predicated region
        $region37: #{tpu_custom_call.1} parent=35 // pred_check
          %p274 = pneg %p273
        $region38: #{tpu_custom_call.1} parent=35 // pred_check_branch
          %276 = sbr.rel (%p274) target = $region40
        $region39: #{tpu_custom_call.1} parent=35 // pred_region
          %v277 = vld [vmem:[%s255] sm:$0xf]
          %v278 = vld [vmem:[%s267] sm:$0xff]
          %280 = vset.pattern.permute.xlu0 0
          %281 = vperm.xlu0 %280, %v277
          %v282 = vpop.permute.xlu0 %281
          %v284 = vunpack.c.l.s4 839922192
          %v285 = vunpack.c.0.s8 %v284
          %v286 = vperm.slane %v282, %v285
          %v288 = vmul.f32 %v278, %v286
          %290 = vst [vmem:[#allocation1] ss:$2 sm:$0xff] %v288
          %v291 = vld.sshfl [vmem:[#allocation1] sm:$0xff pattern:$0x75316420]
          %v292 = vld.sshfl [vmem:[#allocation1 + $0x8] sm:$0xff pattern:$0x75316420]
          %295 = vst [vmem:[#allocation2] sm:$0xf] %v291
          %vm296 = vcmask 781312
          %297 = vst.msk [vmem:[#allocation2 + $0x8] sm:$0xf] %vm296, %v292
          %v298 = vld [vmem:[%s267] sm:$0xff]
          %v299 = vmul.f32 %v298, %v286
          %s301 = scalar_lea.vmem [#allocation1], 1
          %302 = vst [vmem:[%s301] ss:$2 sm:$0xff] %v299
          %v303 = vld.sshfl [vmem:[#allocation1] sm:$0xff pattern:$0x75316420]
          %v304 = vld.sshfl [vmem:[#allocation1 + $0x8] sm:$0xff pattern:$0x75316420]
          %305 = vrot.lane.b32.xlu0 %v303, 127
          %v306 = vpop.permute.xlu0 %305
          %307 = vrot.lane.b32.xlu0 %v304, 127
          %v308 = vpop.permute.xlu0 %307
          %vm309 = vcmask 1039360
          %v310 = vsel %vm309, %v306, %v308
          %313 = vst [vmem:[#allocation2] sm:$0xf0] %v310
          %vm314 = vcmask 785412
          %315 = vst.msk [vmem:[#allocation2 + $0x8] sm:$0xf0] %vm314, %v308
          %v316 = vld [vmem:[%s267] sm:$0xff]
          %v317 = vmul.f32 %v316, %v286
          %319 = vst [vmem:[#allocation1] ss:$2 sm:$0xff] %v317
          %v320 = vld.sshfl [vmem:[#allocation1] sm:$0xff pattern:$0x75316420]
          %v321 = vld.sshfl [vmem:[#allocation1 + $0x8] sm:$0xff pattern:$0x75316420]
          %322 = vrot.lane.b32.xlu0 %v320, 126
          %v323 = vpop.permute.xlu0 %322
          %324 = vrot.lane.b32.xlu0 %v321, 126
          %v325 = vpop.permute.xlu0 %324
          %vm326 = vcmask 1031168
          %v327 = vsel %vm326, %v323, %v325
          %330 = vst [vmem:[#allocation2 + $0x10] sm:$0xf] %v327
          %331 = vst.msk [vmem:[#allocation2 + $0x18] sm:$0xf] %vm296, %v325
          %v332 = vld [vmem:[%s267] sm:$0xff]
          %v333 = vmul.f32 %v332, %v286
          %s335 = scalar_lea.vmem [#allocation1], 1
          %336 = vst [vmem:[%s335] ss:$2 sm:$0xff] %v333
          %v337 = vld.sshfl [vmem:[#allocation1] sm:$0xff pattern:$0x75316420]
          %v338 = vld.sshfl [vmem:[#allocation1 + $0x8] sm:$0xff pattern:$0x75316420]
          %339 = vrot.lane.b32.xlu0 %v337, 112
          %v340 = vpop.permute.xlu0 %339
          %341 = vrot.lane.b32.xlu0 %v338, 112
          %v342 = vpop.permute.xlu0 %341
          %vm343 = vcmask 916480
          %v344 = vsel %vm343, %v340, %v342
          %347 = vst [vmem:[#allocation2 + $0x10] sm:$0xf0] %v344
          %348 = vst.msk [vmem:[#allocation2 + $0x18] sm:$0xf0] %vm314, %v342
          %v349 = vld [vmem:[%s267] sm:$0xff]
          %v350 = vmul.f32 %v349, %v286
          %352 = vst [vmem:[#allocation1] ss:$2 sm:$0xff] %v350
          %v353 = vld.sshfl [vmem:[#allocation1] sm:$0xff pattern:$0x75316420]
          %v354 = vld.sshfl [vmem:[#allocation1 + $0x8] sm:$0xff pattern:$0x75316420]
          %355 = vrot.lane.b32.xlu0 %v353, 111
          %v356 = vpop.permute.xlu0 %355
          %357 = vrot.lane.b32.xlu0 %v354, 111
          %v358 = vpop.permute.xlu0 %357
          %vm359 = vcmask 908288
          %v360 = vsel %vm359, %v356, %v358
          %363 = vst [vmem:[#allocation2 + $0x20] sm:$0xf] %v360
          %364 = vst.msk [vmem:[#allocation2 + $0x28] sm:$0xf] %vm296, %v358
          %v365 = vld [vmem:[%s267] sm:$0xff]
          %v366 = vmul.f32 %v365, %v286
          %s368 = scalar_lea.vmem [#allocation1], 1
          %369 = vst [vmem:[%s368] ss:$2 sm:$0xff] %v366
          %v370 = vld.sshfl [vmem:[#allocation1] sm:$0xff pattern:$0x75316420]
          %v371 = vld.sshfl [vmem:[#allocation1 + $0x8] sm:$0xff pattern:$0x75316420]
          %372 = vrot.lane.b32.xlu0 %v370, 110
          %v373 = vpop.permute.xlu0 %372
          %374 = vrot.lane.b32.xlu0 %v371, 110
          %v375 = vpop.permute.xlu0 %374
          %vm376 = vcmask 900096
          %v377 = vsel %vm376, %v373, %v375
          %380 = vst [vmem:[#allocation2 + $0x20] sm:$0xf0] %v377
          %381 = vst.msk [vmem:[#allocation2 + $0x28] sm:$0xf0] %vm314, %v375
          %v382 = vld [vmem:[%s267] sm:$0xff]
          %v383 = vmul.f32 %v382, %v286
          %385 = vst [vmem:[#allocation1] ss:$2 sm:$0xff] %v383
          %v386 = vld.sshfl [vmem:[#allocation1] sm:$0xff pattern:$0x75316420]
          %v387 = vld.sshfl [vmem:[#allocation1 + $0x8] sm:$0xff pattern:$0x75316420]
          %388 = vrot.lane.b32.xlu0 %v386, 96
          %v389 = vpop.permute.xlu0 %388
          %390 = vrot.lane.b32.xlu0 %v387, 96
          %v391 = vpop.permute.xlu0 %390
          %vm392 = vcmask 785408
          %v393 = vsel %vm392, %v389, %v391
          %396 = vst [vmem:[#allocation2 + $0x30] sm:$0xf] %v393
          %397 = vst.msk [vmem:[#allocation2 + $0x38] sm:$0xf] %vm296, %v391
          %v398 = vld [vmem:[%s267] sm:$0xff]
          %v399 = vmul.f32 %v398, %v286
          %s401 = scalar_lea.vmem [#allocation1], 1
          %402 = vst [vmem:[%s401] ss:$2 sm:$0xff] %v399
          %v403 = vld.sshfl [vmem:[#allocation1] sm:$0xff pattern:$0x75316420]
          %v404 = vld.sshfl [vmem:[#allocation1 + $0x8] sm:$0xff pattern:$0x75316420]
          %405 = vrot.lane.b32.xlu0 %v403, 95
          %v406 = vpop.permute.xlu0 %405
          %407 = vrot.lane.b32.xlu0 %v404, 95
          %v408 = vpop.permute.xlu0 %407
          %vm409 = vcmask 777216
          %v410 = vsel %vm409, %v406, %v408
          %413 = vst [vmem:[#allocation2 + $0x30] sm:$0xf0] %v410
          %vm414 = vcmask 777220
          %415 = vst.msk [vmem:[#allocation2 + $0x38] sm:$0xf0] %vm414, %v408
          %vm416 = vcmask 786172
          %417 = vst.msk [vmem:[#allocation2 + $0x38] sm:$0xf0] %vm416, 0.0
          %v418 = vld [vmem:[%s267] sm:$0xff]
          %v419 = vmul.f32 %v418, %v286
          %421 = vst [vmem:[#allocation1] ss:$2 sm:$0xff] %v419
          %v422 = vld.sshfl [vmem:[#allocation1] sm:$0xff pattern:$0x75316420]
          %v423 = vld.sshfl [vmem:[#allocation1 + $0x8] sm:$0xff pattern:$0x75316420]
          %424 = vrot.lane.b32.xlu0 %v422, 94
          %v425 = vpop.permute.xlu0 %424
          %426 = vrot.lane.b32.xlu0 %v423, 94
          %v427 = vpop.permute.xlu0 %426
          %vm428 = vcmask 769024
          %v429 = vsel %vm428, %v425, %v427
          %432 = vst [vmem:[#allocation2 + $0x40] sm:$0xf] %v429
          %vm433 = vcmask 764928
          %434 = vst.msk [vmem:[#allocation2 + $0x48] sm:$0xf] %vm433, %v427
          %vm435 = vcmask 782064
          %436 = vst.msk [vmem:[#allocation2 + $0x48] sm:$0xf] %vm435, 0.0
        $region40: #{tpu_custom_call.1} parent=35 // pred_fallthru
          _
        %v437 = vld [vmem:[%s271] sm:$0xf]
        %v438 = vld [vmem:[#allocation2] sm:$0xff]
        %v439 = vld [vmem:[#allocation2 + $0x8] sm:$0xff]
        %v440 = vld [vmem:[#allocation2 + $0x10] sm:$0xff]
        %v441 = vld [vmem:[#allocation2 + $0x18] sm:$0xff]
        %v442 = vld [vmem:[#allocation2 + $0x20] sm:$0xff]
        %v443 = vld [vmem:[#allocation2 + $0x28] sm:$0xff]
        %v444 = vld [vmem:[#allocation2 + $0x30] sm:$0xff]
        %v445 = vld [vmem:[#allocation2 + $0x38] sm:$0xff]
        %v446 = vld [vmem:[#allocation2 + $0x40] sm:$0xf]
        %v447 = vld [vmem:[#allocation2 + $0x48] sm:$0xf]
        %v448 = vpack.c.bf16 %v440, %v438
        %v449 = vpack.c.bf16 %v441, %v439
        %v450 = vpack.c.bf16 %v444, %v442
        %v451 = vpack.c.bf16 %v445, %v443
        %v452 = vpack.c.bf16 %v446, %v446
        %v453 = vpack.c.bf16 %v447, %v447
        %vm454 = vcmask 293888
        %v456 = vsel %vm454, %v437, 0
        %vm458 = vcmask 1041408
        %v460 = vsel %vm458, %v452, 0
        %v463 = vsel %vm458, %v453, 0
        %465 = vmatpush.bf16.msra.mxu0 0
        %466 = vmatpush.bf16.msra.mxu0 0
        %467 = vmatpush.bf16.msra.mxu0 0
        %468 = vmatpush.bf16.msra.mxu0 0
        %469 = vmatpush.bf16.msra.mxu0 0
        %470 = vmatpush.bf16.msra.mxu0 %v460
        %471 = vmatpush.bf16.msra.mxu0 %v450
        %472 = vmatpush.bf16.msra.mxu0 %v448
        %473 = vmatmul.bf16.gmra.mxu0 %v456
        %v474 = vpop.f32.mrf.mxu0
        %v475 = vadd.f32 0.0, %v474
        %v476 = vpop.f32.mrf.mxu0
        %477 = vdwg.mxu0
        %478 = vmatpush.bf16.msra.mxu0 0
        %479 = vmatpush.bf16.msra.mxu0 0
        %480 = vmatpush.bf16.msra.mxu0 0
        %481 = vmatpush.bf16.msra.mxu0 0
        %482 = vmatpush.bf16.msra.mxu0 0
        %483 = vmatpush.bf16.msra.mxu0 %v463
        %484 = vmatpush.bf16.msra.mxu0 %v451
        %485 = vmatpush.bf16.msra.mxu0 %v449
        %486 = vmatmul.bf16.gmra.mxu0 %v456
        %v487 = vpop.f32.mrf.mxu0
        %v488 = vadd.f32 0.0, %v487
        %v489 = vpop.f32.mrf.mxu0
        %490 = vdwg.mxu0
        %v491 = vld [vmem:[%s262] sm:$0xff]
        %493 = vset.pattern.permute.xlu0 0
        %494 = vperm.xlu0 %493, %v491
        %v495 = vpop.permute.xlu0 %494
        %v497 = vmul.f32 %v475, %v495
        %v498 = vmul.f32 %v488, %v495
        %499 = vst [vmem:[%s251] sm:$0xff] %v497
        %vm500 = vcmask 785408
        %501 = vst.msk [vmem:[%s251 + $0x8] sm:$0xff] %vm500, %v498
        %s502 = sand.u32 %s146, 1
        %s503 = scalar_lea.sflag [#allocation4], %s502
        %s504 = sand.u32 %s146, 1
        %s505 = smul.addr %s504, 16
        %s506 = scalar_lea.vmem [#allocation3], %s505
        // Predicated region
        $region41: #{tpu_custom_call.1} parent=35 // pred_check
          %p507 = pneg %p156
        $region42: #{tpu_custom_call.1} parent=35 // pred_check_branch
          %509 = sbr.rel (%p507) target = $region44
        $region43: #{tpu_custom_call.1} parent=35 // pred_region
          %511 = vsyncadd %s503, 0
          %s512 = smul.addr %s23, 2
          %s513 = smul.addr %s22, 2
          %s514 = sadd.s32 %s512, %s513
          %s515 = smul.addr %s514, 8
          %s516 = scalar_lea.hbm %s4, %s515
          %s518 = sshll.u32 %s506, 4
          %s519 = int_to_ptr.vmem [resolvable:$true] %s518
          %s520 = sshll.u32 %s516, 4
          %s521 = int_to_ptr.hbm [resolvable:$true] %s520
          %523 = dma.vmem_to_hbm [thread:$0]  %s519, 256, %s521, %s503
        $region44: #{tpu_custom_call.1} parent=35 // pred_fallthru
          _
      $region36: #{tpu_custom_call.1} parent=5 // pred_fallthru
        _
      %p524 = scmp.le.s32.totalorder 2, %s13
      // Predicated region
      $region45: #{tpu_custom_call.1} parent=5 // pred_check
        %p525 = pneg %p524
      $region46: #{tpu_custom_call.1} parent=5 // pred_check_branch
        %527 = sbr.rel (%p525) target = $region48
      $region47: #{tpu_custom_call.1} parent=5 // pred_region
        %s528 = ssub.s32 %s13, 2
        // Predicated region
        $region49: #{tpu_custom_call.1} parent=47 // pred_check
          %p529 = pneg %p162
        $region50: #{tpu_custom_call.1} parent=47 // pred_check_branch
          %531 = sbr.rel (%p529) target = $region52
        $region51: #{tpu_custom_call.1} parent=47 // pred_region
          %s532 = sand.u32 %s147, 1
          %s533 = scalar_lea.sflag [#allocation4], %s532
          %s534 = sand.u32 %s147, 1
          %s535 = smul.addr %s534, 16
          %s536 = scalar_lea.vmem [#allocation3], %s535
          %538 = dma.done %s533, 256
        $region52: #{tpu_custom_call.1} parent=47 // pred_fallthru
          _
      $region48: #{tpu_custom_call.1} parent=5 // pred_fallthru
        _
    $region6: #{tpu_custom_call.1} parent=1 // loop_footer
      %s17 = sadd.s32 1, %s13
    $region7: #{tpu_custom_call.1} parent=1 // loop_footer_branch
      %12 = sbr.rel target = $region3
    $region8: #{tpu_custom_call.1} parent=1 // loop_exit
      _
    %539 = vsyncpa [#allocation4], 1
    %s540 = scalar_lea.sflag [#allocation4], 1
    %541 = vsyncpa %s540, 1

</llo_original>
